<compile_context>
chip_gen: v6e
topology: v6e:2x2x1
jax: 0.10.0
libtpu: 0.0.40
codegen_flags: <defaults>
</compile_context>

<pallas_src>
import functools

import jax
import jax.numpy as jnp
from jax.experimental import pallas as pl
from jax.experimental.pallas import tpu as pltpu


_B_POOL = 128          # lane width used to pack per-image pooled vectors
_MAX_BATCH_TILE = 8    # max images lane-batched per grid step
_LANE_BUDGET = 4096    # cap B_TILE*HW so the per-step working set stays small


# ----------------------------------------------------------------------------- kernel
def _iaff_kernel(x_ref, r_ref, w1_ref, w2_ref, b_ref, p_ref, e_ref, o_ref, *, ic, c):
    # x_ref/r_ref/o_ref : (C, B_TILE*HW)  channels on sublanes, images packed along lanes
    # w1_ref : (3*IC, C)   BN-folded first 1x1 convs  [local, global, local2]
    # w2_ref : (3*C, IC)   BN-folded second 1x1 convs [local, global, local2]
    # b_ref  : (3*IC + 3*C, 1) packed biases [b1_l, b1_g, b1_l2, b2_l, b2_g, b2_l2]
    # p_ref  : (B_TILE*HW, 128) block-diagonal average-pooling matrix (1/HW entries)
    # e_ref  : (128, B_TILE*HW) broadcast-back matrix (1.0 entries)

    def sigmoid(z):
        # Exact sigmoid via tanh: EUP-resident, no f32 divide, no exp overflow.
        return 0.5 * (jnp.tanh(0.5 * z) + 1.0)

    def channel_mlp(z, widx):
        # BN-folded: 1x1 conv -> ReLU -> 1x1 conv along the channel (sublane) dim.
        # widx selects the packed weight slab (0=local, 1=global, 2=local2); static slices.
        w1 = w1_ref[pl.ds(widx * ic, ic), :]
        b1 = b_ref[pl.ds(widx * ic, ic), :]
        w2 = w2_ref[pl.ds(widx * c, c), :]
        b2 = b_ref[pl.ds(3 * ic + widx * c, c), :]
        h = jnp.maximum(jnp.dot(w1, z, preferred_element_type=jnp.float32) + b1, 0.0)
        return jnp.dot(w2, h, preferred_element_type=jnp.float32) + b2

    def attention_weights(z, local_idx):
        xl = channel_mlp(z, local_idx)                                          # (C, BHW)
        # Per-image AdaptiveAvgPool2d(1) as one MXU matmul; pooled vectors of all
        # images in the block land in the lanes of a single (C, 128) tile.
        pooled = jnp.dot(z, p_ref[...], preferred_element_type=jnp.float32)     # (C, 128)
        xg = channel_mlp(pooled, 1)                                             # shared global_att
        xg_full = jnp.dot(xg, e_ref[...], preferred_element_type=jnp.float32)   # (C, BHW)
        return sigmoid(xl + xg_full)

    # ---- pass 1
    wei = attention_weights(x_ref[...] + r_ref[...], 0)
    xi = x_ref[...] * wei + r_ref[...] * (1.0 - wei)

    # ---- pass 2 (faithful to PyTorch forward(): global_att reused, global_att2 unused)
    wei2 = attention_weights(xi, 2)
    o_ref[...] = x_ref[...] * wei2 + r_ref[...] * (1.0 - wei2)


# ----------------------------------------------------------------------------- wrapper
def _fold_conv_bn(conv_w, conv_b, gamma, beta, mean, var, eps=1e-5):
    """Fold inference-mode BatchNorm into the preceding 1x1 conv.
    conv_w: (Cout, Cin, 1, 1) -> W' (Cout, Cin), b' (Cout, 1)."""
    w = conv_w[:, :, 0, 0]
    s = gamma / jnp.sqrt(var + eps)
    w_f = (w * s[:, None]).astype(jnp.float32)
    b_f = (s * (conv_b - mean) + beta).astype(jnp.float32)
    return w_f, b_f[:, None]


def _fold_branch(p):
    w1, b1 = _fold_conv_bn(p['conv1_w'], p['conv1_b'],
                           p['bn1_gamma'], p['bn1_beta'], p['bn1_mean'], p['bn1_var'])
    w2, b2 = _fold_conv_bn(p['conv2_w'], p['conv2_b'],
                           p['bn2_gamma'], p['bn2_beta'], p['bn2_mean'], p['bn2_var'])
    return w1, b1, w2, b2


def iaff_forward(x, residual, params):
    """x, residual: (N, C, H, W) f32. params: dict with 'local_att', 'global_att',
    'local_att2' branch parameter dicts. Returns (N, C, H, W) f32."""
    n, c, h, w = x.shape
    hw = h * w
    assert c % 8 == 0, "channels must be a multiple of 8 for sublane-aligned packing"

    w1l, b1l, w2l, b2l = _fold_branch(params['local_att'])
    w1g, b1g, w2g, b2g = _fold_branch(params['global_att'])
    w1l2, b1l2, w2l2, b2l2 = _fold_branch(params['local_att2'])
    ic = w1l.shape[0]
    assert ic % 8 == 0, "inter_channels must be a multiple of 8 for sublane-aligned packing"

    # Pack the 12 tiny conv/BN operands into 3 arrays (fewer DMA buffers / descriptors).
    w1_pack = jnp.concatenate([w1l, w1g, w1l2], axis=0)                       # (3*IC, C)
    w2_pack = jnp.concatenate([w2l, w2g, w2l2], axis=0)                       # (3*C, IC)
    b_pack = jnp.concatenate([b1l, b1g, b1l2, b2l, b2g, b2l2], axis=0)        # (3*IC+3*C, 1)

    # Lane-batch several images per grid step. Keep >= 2 grid steps when N >= 2 so
    # both v7x TensorCores get work; cap block lanes against the VMEM budget.
    bt = max(1, min(_MAX_BATCH_TILE, pl.cdiv(n, 2), max(1, _LANE_BUDGET // hw)))
    bt = int(bt)
    n_blocks = int(pl.cdiv(n, bt))
    n_pad = n_blocks * bt
    if n_pad != n:
        pad = ((0, n_pad - n), (0, 0), (0, 0), (0, 0))
        x = jnp.pad(x, pad)
        residual = jnp.pad(residual, pad)
    bhw = bt * hw

    # Host-side layout plumbing: (N, C, H, W) -> (n_blocks, C, B_TILE*HW) lane-dense slabs.
    xb = x.reshape(n_blocks, bt, c, hw).transpose(0, 2, 1, 3).reshape(n_blocks, c, bhw)
    rb = residual.reshape(n_blocks, bt, c, hw).transpose(0, 2, 1, 3).reshape(n_blocks, c, bhw)

    # Constant pooling / broadcast matrices: per-image mean as a block-diagonal matmul.
    img_id = jnp.arange(bhw, dtype=jnp.int32) // hw                           # (BHW,)
    col_id = jnp.arange(_B_POOL, dtype=jnp.int32)                             # (128,)
    pool_mat = jnp.where(img_id[:, None] == col_id[None, :],
                         jnp.float32(1.0 / hw), 0.0).astype(jnp.float32)      # (BHW, 128)
    expand_mat = jnp.where(col_id[:, None] == img_id[None, :],
                           1.0, 0.0).astype(jnp.float32)                      # (128, BHW)

    img_spec = pl.BlockSpec((None, c, bhw), lambda b: (b, 0, 0))

    def const_spec(shape):
        return pl.BlockSpec(shape, lambda b: (0, 0))

    # Advisory cost estimate.
    flops = n_blocks * (8 * ic * c * bhw             # 2 local branches x 2 matmuls x 2 passes
                        + 8 * c * bhw * _B_POOL      # pooling + broadcast matmuls, 2 passes
                        + 8 * ic * c * _B_POOL)      # global channel MLP, 2 passes
    transcendentals = n_blocks * 2 * c * bhw         # two sigmoids (tanh)
    bytes_accessed = 4 * (3 * n_blocks * c * bhw
                          + int(w1_pack.size) + int(w2_pack.size) + int(b_pack.size)
                          + int(pool_mat.size) + int(expand_mat.size))

    kernel = functools.partial(_iaff_kernel, ic=ic, c=c)

    out = pl.pallas_call(
        kernel,
        out_shape=jax.ShapeDtypeStruct((n_blocks, c, bhw), jnp.float32),
        grid_spec=pltpu.PrefetchScalarGridSpec(
            num_scalar_prefetch=0,
            grid=(n_blocks,),
            in_specs=[
                img_spec, img_spec,
                const_spec((3 * ic, c)),
                const_spec((3 * c, ic)),
                const_spec((3 * ic + 3 * c, 1)),
                const_spec((bhw, _B_POOL)),
                const_spec((_B_POOL, bhw)),
            ],
            out_specs=pl.BlockSpec((None, c, bhw), lambda b: (b, 0, 0)),
        ),
        compiler_params=pltpu.CompilerParams(
            dimension_semantics=("parallel",),
            vmem_limit_bytes=32 * 1024 * 1024,       # fits v7x (64 MiB phys) and v5e/v6e
        ),
        cost_estimate=pl.CostEstimate(
            flops=int(flops), transcendentals=int(transcendentals),
            bytes_accessed=int(bytes_accessed)),
    )(xb, rb, w1_pack, w2_pack, b_pack, pool_mat, expand_mat)

    out = out.reshape(n_blocks, c, bt, hw).transpose(0, 2, 1, 3).reshape(n_pad, c, h, w)
    return out[:n]


# ----------------------------------------------------------------------------- reference
def _bn_eval(z, gamma, beta, mean, var, eps=1e-5):
    inv = gamma / jnp.sqrt(var + eps)
    return (z - mean[None, :, None, None]) * inv[None, :, None, None] + beta[None, :, None, None]


def _conv1x1(z, w, b):
    out = jnp.einsum('oc,nchw->nohw', w[:, :, 0, 0], z, precision=jax.lax.Precision.HIGHEST)
    return out + b[None, :, None, None]


def _att_branch_ref(z, p, global_pool):
    if global_pool:
        z = jnp.mean(z, axis=(2, 3), keepdims=True)
    h = _conv1x1(z, p['conv1_w'], p['conv1_b'])
    h = _bn_eval(h, p['bn1_gamma'], p['bn1_beta'], p['bn1_mean'], p['bn1_var'])
    h = jnp.maximum(h, 0.0)
    h = _conv1x1(h, p['conv2_w'], p['conv2_b'])
    h = _bn_eval(h, p['bn2_gamma'], p['bn2_beta'], p['bn2_mean'], p['bn2_var'])
    return h


def iaff_reference(x, residual, params):
    xa = x + residual
    xl = _att_branch_ref(xa, params['local_att'], False)
    xg = _att_branch_ref(xa, params['global_att'], True)
    wei = jax.nn.sigmoid(xl + xg)
    xi = x * wei + residual * (1.0 - wei)
    xl2 = _att_branch_ref(xi, params['local_att2'], False)
    xg2 = _att_branch_ref(xi, params['global_att'], True)   # forward() reuses global_att
    wei2 = jax.nn.sigmoid(xl2 + xg2)
    return x * wei2 + residual * (1.0 - wei2)


# ----------------------------------------------------------------------------- main
if __name__ == "__main__":
    key = jax.random.PRNGKey(0)
    batch, channels, r, size = 2, 64, 4, 16
    inter = channels // r

    kit = iter(jax.random.split(key, 40))

    def nrm(shape, scale=0.1):
        return scale * jax.random.normal(next(kit), shape, dtype=jnp.float32)

    def make_branch():
        return dict(
            conv1_w=nrm((inter, channels, 1, 1), 0.2),
            conv1_b=nrm((inter,)),
            bn1_gamma=1.0 + nrm((inter,)),
            bn1_beta=nrm((inter,)),
            bn1_mean=nrm((inter,)),
            bn1_var=0.5 + jax.random.uniform(next(kit), (inter,), dtype=jnp.float32),
            conv2_w=nrm((channels, inter, 1, 1), 0.2),
            conv2_b=nrm((channels,)),
            bn2_gamma=1.0 + nrm((channels,)),
            bn2_beta=nrm((channels,)),
            bn2_mean=nrm((channels,)),
            bn2_var=0.5 + jax.random.uniform(next(kit), (channels,), dtype=jnp.float32),
        )

    # global_att2 exists in the PyTorch __init__ but is never used by forward(); omitted.
    params = dict(local_att=make_branch(), global_att=make_branch(), local_att2=make_branch())

    x = jax.random.normal(next(kit), (batch, channels, size, size), dtype=jnp.float32)
    residual = jax.random.normal(next(kit), (batch, channels, size, size), dtype=jnp.float32)

    out = iaff_forward(x, residual, params)
    out = jax.block_until_ready(out)
    assert out.shape == (batch, channels, size, size), out.shape

    ref = iaff_reference(x, residual, params)
    max_err = float(jnp.max(jnp.abs(out - ref)))
    assert jnp.allclose(out, ref, rtol=1e-4, atol=2e-4), max_err

    print("KERNEL_OK")
</pallas_src>

<mosaic_0001>
module attributes {stable_mosaic.version = 11 : i64} {
  func.func @_iaff_kernel(%arg0: i32, %arg1: memref<1x64x256xf32, #tpu.memory_space<vmem>>, %arg2: memref<1x64x256xf32, #tpu.memory_space<vmem>>, %arg3: memref<48x64xf32, #tpu.memory_space<vmem>>, %arg4: memref<192x16xf32, #tpu.memory_space<vmem>>, %arg5: memref<240x1xf32, #tpu.memory_space<vmem>>, %arg6: memref<256x128xf32, #tpu.memory_space<vmem>>, %arg7: memref<128x256xf32, #tpu.memory_space<vmem>>, %arg8: memref<1x64x256xf32, #tpu.memory_space<vmem>>) attributes {dimension_semantics = [#tpu.dimension_semantics<parallel>], iteration_bounds = array<i64: 2>, scalar_prefetch = 0 : i64, scratch_operands = 0 : i64, tpu.core_type = #tpu.core_type<tc>, window_params = [{transform_indices = @transform_0, window_bounds = array<i64: 1, 64, 256>}, {transform_indices = @transform_1, window_bounds = array<i64: 1, 64, 256>}, {pipeline_mode = #tpu.pipeline_mode<synchronous>, transform_indices = @transform_2, window_bounds = array<i64: 48, 64>}, {pipeline_mode = #tpu.pipeline_mode<synchronous>, transform_indices = @transform_3, window_bounds = array<i64: 192, 16>}, {pipeline_mode = #tpu.pipeline_mode<synchronous>, transform_indices = @transform_4, window_bounds = array<i64: 240, 1>}, {pipeline_mode = #tpu.pipeline_mode<synchronous>, transform_indices = @transform_5, window_bounds = array<i64: 256, 128>}, {pipeline_mode = #tpu.pipeline_mode<synchronous>, transform_indices = @transform_6, window_bounds = array<i64: 128, 256>}, {transform_indices = @transform_7, window_bounds = array<i64: 1, 64, 256>}]} {
    %c0 = arith.constant 0 : index
    %c0_0 = arith.constant 0 : index
    %c0_1 = arith.constant 0 : index
    %0 = vector.load %arg1[%c0, %c0_0, %c0_1] : memref<1x64x256xf32, #tpu.memory_space<vmem>>, vector<1x64x256xf32>
    %1 = vector.shape_cast %0 : vector<1x64x256xf32> to vector<64x256xf32>
    %c0_2 = arith.constant 0 : index
    %c0_3 = arith.constant 0 : index
    %c0_4 = arith.constant 0 : index
    %2 = vector.load %arg2[%c0_2, %c0_3, %c0_4] : memref<1x64x256xf32, #tpu.memory_space<vmem>>, vector<1x64x256xf32>
    %3 = vector.shape_cast %2 : vector<1x64x256xf32> to vector<64x256xf32>
    %4 = arith.addf %1, %3 : vector<64x256xf32>
    %c0_5 = arith.constant 0 : index
    %c0_6 = arith.constant 0 : index
    %5 = vector.load %arg3[%c0_5, %c0_6] : memref<48x64xf32, #tpu.memory_space<vmem>>, vector<16x64xf32>
    %c0_7 = arith.constant 0 : index
    %c0_8 = arith.constant 0 : index
    %6 = vector.load %arg5[%c0_7, %c0_8] : memref<240x1xf32, #tpu.memory_space<vmem>>, vector<16x1xf32>
    %c0_9 = arith.constant 0 : index
    %c0_10 = arith.constant 0 : index
    %7 = vector.load %arg4[%c0_9, %c0_10] : memref<192x16xf32, #tpu.memory_space<vmem>>, vector<64x16xf32>
    %c48 = arith.constant 48 : index
    %c0_11 = arith.constant 0 : index
    %8 = vector.load %arg5[%c48, %c0_11] : memref<240x1xf32, #tpu.memory_space<vmem>>, vector<64x1xf32>
    %cst = arith.constant dense<0.000000e+00> : vector<16x256xf32>
    %9 = tpu.matmul %5, %4, %cst {dimension_numbers = #tpu.dot_dimension_numbers<[1], [0], [0], [1], [0, 0, 1, 1], [], []>} : vector<16x64xf32>, vector<64x256xf32>, vector<16x256xf32> -> vector<16x256xf32>
    %10 = vector.broadcast %6 : vector<16x1xf32> to vector<16x256xf32>
    %11 = arith.addf %9, %10 : vector<16x256xf32>
    %cst_12 = arith.constant 0.000000e+00 : f32
    %12 = vector.broadcast %cst_12 : f32 to vector<16x256xf32>
    %13 = arith.maximumf %11, %12 : vector<16x256xf32>
    %cst_13 = arith.constant dense<0.000000e+00> : vector<64x256xf32>
    %14 = tpu.matmul %7, %13, %cst_13 {dimension_numbers = #tpu.dot_dimension_numbers<[1], [0], [0], [1], [0, 0, 1, 1], [], []>} : vector<64x16xf32>, vector<16x256xf32>, vector<64x256xf32> -> vector<64x256xf32>
    %15 = vector.broadcast %8 : vector<64x1xf32> to vector<64x256xf32>
    %16 = arith.addf %14, %15 : vector<64x256xf32>
    %c0_14 = arith.constant 0 : index
    %c0_15 = arith.constant 0 : index
    %17 = vector.load %arg6[%c0_14, %c0_15] : memref<256x128xf32, #tpu.memory_space<vmem>>, vector<256x128xf32>
    %cst_16 = arith.constant dense<0.000000e+00> : vector<64x128xf32>
    %18 = tpu.matmul %4, %17, %cst_16 {dimension_numbers = #tpu.dot_dimension_numbers<[1], [0], [0], [1], [0, 0, 1, 1], [], []>} : vector<64x256xf32>, vector<256x128xf32>, vector<64x128xf32> -> vector<64x128xf32>
    %c16 = arith.constant 16 : index
    %c0_17 = arith.constant 0 : index
    %19 = vector.load %arg3[%c16, %c0_17] : memref<48x64xf32, #tpu.memory_space<vmem>>, vector<16x64xf32>
    %c16_18 = arith.constant 16 : index
    %c0_19 = arith.constant 0 : index
    %20 = vector.load %arg5[%c16_18, %c0_19] : memref<240x1xf32, #tpu.memory_space<vmem>>, vector<16x1xf32>
    %c64 = arith.constant 64 : index
    %c0_20 = arith.constant 0 : index
    %21 = vector.load %arg4[%c64, %c0_20] : memref<192x16xf32, #tpu.memory_space<vmem>>, vector<64x16xf32>
    %c112 = arith.constant 112 : index
    %c0_21 = arith.constant 0 : index
    %22 = vector.load %arg5[%c112, %c0_21] : memref<240x1xf32, #tpu.memory_space<vmem>>, vector<64x1xf32>
    %cst_22 = arith.constant dense<0.000000e+00> : vector<16x128xf32>
    %23 = tpu.matmul %19, %18, %cst_22 {dimension_numbers = #tpu.dot_dimension_numbers<[1], [0], [0], [1], [0, 0, 1, 1], [], []>} : vector<16x64xf32>, vector<64x128xf32>, vector<16x128xf32> -> vector<16x128xf32>
    %24 = vector.broadcast %20 : vector<16x1xf32> to vector<16x128xf32>
    %25 = arith.addf %23, %24 : vector<16x128xf32>
    %cst_23 = arith.constant 0.000000e+00 : f32
    %26 = vector.broadcast %cst_23 : f32 to vector<16x128xf32>
    %27 = arith.maximumf %25, %26 : vector<16x128xf32>
    %cst_24 = arith.constant dense<0.000000e+00> : vector<64x128xf32>
    %28 = tpu.matmul %21, %27, %cst_24 {dimension_numbers = #tpu.dot_dimension_numbers<[1], [0], [0], [1], [0, 0, 1, 1], [], []>} : vector<64x16xf32>, vector<16x128xf32>, vector<64x128xf32> -> vector<64x128xf32>
    %29 = vector.broadcast %22 : vector<64x1xf32> to vector<64x128xf32>
    %30 = arith.addf %28, %29 : vector<64x128xf32>
    %c0_25 = arith.constant 0 : index
    %c0_26 = arith.constant 0 : index
    %31 = vector.load %arg7[%c0_25, %c0_26] : memref<128x256xf32, #tpu.memory_space<vmem>>, vector<128x256xf32>
    %cst_27 = arith.constant dense<0.000000e+00> : vector<64x256xf32>
    %32 = tpu.matmul %30, %31, %cst_27 {dimension_numbers = #tpu.dot_dimension_numbers<[1], [0], [0], [1], [0, 0, 1, 1], [], []>} : vector<64x128xf32>, vector<128x256xf32>, vector<64x256xf32> -> vector<64x256xf32>
    %33 = arith.addf %16, %32 : vector<64x256xf32>
    %cst_28 = arith.constant 5.000000e-01 : f32
    %34 = vector.broadcast %cst_28 : f32 to vector<64x256xf32>
    %35 = arith.mulf %34, %33 : vector<64x256xf32>
    %36 = math.tanh %35 : vector<64x256xf32>
    %cst_29 = arith.constant 1.000000e+00 : f32
    %37 = vector.broadcast %cst_29 : f32 to vector<64x256xf32>
    %38 = arith.addf %36, %37 : vector<64x256xf32>
    %cst_30 = arith.constant 5.000000e-01 : f32
    %39 = vector.broadcast %cst_30 : f32 to vector<64x256xf32>
    %40 = arith.mulf %39, %38 : vector<64x256xf32>
    %c0_31 = arith.constant 0 : index
    %c0_32 = arith.constant 0 : index
    %c0_33 = arith.constant 0 : index
    %41 = vector.load %arg1[%c0_31, %c0_32, %c0_33] : memref<1x64x256xf32, #tpu.memory_space<vmem>>, vector<1x64x256xf32>
    %42 = vector.shape_cast %41 : vector<1x64x256xf32> to vector<64x256xf32>
    %43 = arith.mulf %42, %40 : vector<64x256xf32>
    %c0_34 = arith.constant 0 : index
    %c0_35 = arith.constant 0 : index
    %c0_36 = arith.constant 0 : index
    %44 = vector.load %arg2[%c0_34, %c0_35, %c0_36] : memref<1x64x256xf32, #tpu.memory_space<vmem>>, vector<1x64x256xf32>
    %45 = vector.shape_cast %44 : vector<1x64x256xf32> to vector<64x256xf32>
    %cst_37 = arith.constant 1.000000e+00 : f32
    %46 = vector.broadcast %cst_37 : f32 to vector<64x256xf32>
    %47 = arith.subf %46, %40 : vector<64x256xf32>
    %48 = arith.mulf %45, %47 : vector<64x256xf32>
    %49 = arith.addf %43, %48 : vector<64x256xf32>
    %c32 = arith.constant 32 : index
    %c0_38 = arith.constant 0 : index
    %50 = vector.load %arg3[%c32, %c0_38] : memref<48x64xf32, #tpu.memory_space<vmem>>, vector<16x64xf32>
    %c32_39 = arith.constant 32 : index
    %c0_40 = arith.constant 0 : index
    %51 = vector.load %arg5[%c32_39, %c0_40] : memref<240x1xf32, #tpu.memory_space<vmem>>, vector<16x1xf32>
    %c128 = arith.constant 128 : index
    %c0_41 = arith.constant 0 : index
    %52 = vector.load %arg4[%c128, %c0_41] : memref<192x16xf32, #tpu.memory_space<vmem>>, vector<64x16xf32>
    %c176 = arith.constant 176 : index
    %c0_42 = arith.constant 0 : index
    %53 = vector.load %arg5[%c176, %c0_42] : memref<240x1xf32, #tpu.memory_space<vmem>>, vector<64x1xf32>
    %cst_43 = arith.constant dense<0.000000e+00> : vector<16x256xf32>
    %54 = tpu.matmul %50, %49, %cst_43 {dimension_numbers = #tpu.dot_dimension_numbers<[1], [0], [0], [1], [0, 0, 1, 1], [], []>} : vector<16x64xf32>, vector<64x256xf32>, vector<16x256xf32> -> vector<16x256xf32>
    %55 = vector.broadcast %51 : vector<16x1xf32> to vector<16x256xf32>
    %56 = arith.addf %54, %55 : vector<16x256xf32>
    %cst_44 = arith.constant 0.000000e+00 : f32
    %57 = vector.broadcast %cst_44 : f32 to vector<16x256xf32>
    %58 = arith.maximumf %56, %57 : vector<16x256xf32>
    %cst_45 = arith.constant dense<0.000000e+00> : vector<64x256xf32>
    %59 = tpu.matmul %52, %58, %cst_45 {dimension_numbers = #tpu.dot_dimension_numbers<[1], [0], [0], [1], [0, 0, 1, 1], [], []>} : vector<64x16xf32>, vector<16x256xf32>, vector<64x256xf32> -> vector<64x256xf32>
    %60 = vector.broadcast %53 : vector<64x1xf32> to vector<64x256xf32>
    %61 = arith.addf %59, %60 : vector<64x256xf32>
    %c0_46 = arith.constant 0 : index
    %c0_47 = arith.constant 0 : index
    %62 = vector.load %arg6[%c0_46, %c0_47] : memref<256x128xf32, #tpu.memory_space<vmem>>, vector<256x128xf32>
    %cst_48 = arith.constant dense<0.000000e+00> : vector<64x128xf32>
    %63 = tpu.matmul %49, %62, %cst_48 {dimension_numbers = #tpu.dot_dimension_numbers<[1], [0], [0], [1], [0, 0, 1, 1], [], []>} : vector<64x256xf32>, vector<256x128xf32>, vector<64x128xf32> -> vector<64x128xf32>
    %c16_49 = arith.constant 16 : index
    %c0_50 = arith.constant 0 : index
    %64 = vector.load %arg3[%c16_49, %c0_50] : memref<48x64xf32, #tpu.memory_space<vmem>>, vector<16x64xf32>
    %c16_51 = arith.constant 16 : index
    %c0_52 = arith.constant 0 : index
    %65 = vector.load %arg5[%c16_51, %c0_52] : memref<240x1xf32, #tpu.memory_space<vmem>>, vector<16x1xf32>
    %c64_53 = arith.constant 64 : index
    %c0_54 = arith.constant 0 : index
    %66 = vector.load %arg4[%c64_53, %c0_54] : memref<192x16xf32, #tpu.memory_space<vmem>>, vector<64x16xf32>
    %c112_55 = arith.constant 112 : index
    %c0_56 = arith.constant 0 : index
    %67 = vector.load %arg5[%c112_55, %c0_56] : memref<240x1xf32, #tpu.memory_space<vmem>>, vector<64x1xf32>
    %cst_57 = arith.constant dense<0.000000e+00> : vector<16x128xf32>
    %68 = tpu.matmul %64, %63, %cst_57 {dimension_numbers = #tpu.dot_dimension_numbers<[1], [0], [0], [1], [0, 0, 1, 1], [], []>} : vector<16x64xf32>, vector<64x128xf32>, vector<16x128xf32> -> vector<16x128xf32>
    %69 = vector.broadcast %65 : vector<16x1xf32> to vector<16x128xf32>
    %70 = arith.addf %68, %69 : vector<16x128xf32>
    %cst_58 = arith.constant 0.000000e+00 : f32
    %71 = vector.broadcast %cst_58 : f32 to vector<16x128xf32>
    %72 = arith.maximumf %70, %71 : vector<16x128xf32>
    %cst_59 = arith.constant dense<0.000000e+00> : vector<64x128xf32>
    %73 = tpu.matmul %66, %72, %cst_59 {dimension_numbers = #tpu.dot_dimension_numbers<[1], [0], [0], [1], [0, 0, 1, 1], [], []>} : vector<64x16xf32>, vector<16x128xf32>, vector<64x128xf32> -> vector<64x128xf32>
    %74 = vector.broadcast %67 : vector<64x1xf32> to vector<64x128xf32>
    %75 = arith.addf %73, %74 : vector<64x128xf32>
    %c0_60 = arith.constant 0 : index
    %c0_61 = arith.constant 0 : index
    %76 = vector.load %arg7[%c0_60, %c0_61] : memref<128x256xf32, #tpu.memory_space<vmem>>, vector<128x256xf32>
    %cst_62 = arith.constant dense<0.000000e+00> : vector<64x256xf32>
    %77 = tpu.matmul %75, %76, %cst_62 {dimension_numbers = #tpu.dot_dimension_numbers<[1], [0], [0], [1], [0, 0, 1, 1], [], []>} : vector<64x128xf32>, vector<128x256xf32>, vector<64x256xf32> -> vector<64x256xf32>
    %78 = arith.addf %61, %77 : vector<64x256xf32>
    %cst_63 = arith.constant 5.000000e-01 : f32
    %79 = vector.broadcast %cst_63 : f32 to vector<64x256xf32>
    %80 = arith.mulf %79, %78 : vector<64x256xf32>
    %81 = math.tanh %80 : vector<64x256xf32>
    %cst_64 = arith.constant 1.000000e+00 : f32
    %82 = vector.broadcast %cst_64 : f32 to vector<64x256xf32>
    %83 = arith.addf %81, %82 : vector<64x256xf32>
    %cst_65 = arith.constant 5.000000e-01 : f32
    %84 = vector.broadcast %cst_65 : f32 to vector<64x256xf32>
    %85 = arith.mulf %84, %83 : vector<64x256xf32>
    %c0_66 = arith.constant 0 : index
    %c0_67 = arith.constant 0 : index
    %c0_68 = arith.constant 0 : index
    %86 = vector.load %arg1[%c0_66, %c0_67, %c0_68] : memref<1x64x256xf32, #tpu.memory_space<vmem>>, vector<1x64x256xf32>
    %87 = vector.shape_cast %86 : vector<1x64x256xf32> to vector<64x256xf32>
    %88 = arith.mulf %87, %85 : vector<64x256xf32>
    %c0_69 = arith.constant 0 : index
    %c0_70 = arith.constant 0 : index
    %c0_71 = arith.constant 0 : index
    %89 = vector.load %arg2[%c0_69, %c0_70, %c0_71] : memref<1x64x256xf32, #tpu.memory_space<vmem>>, vector<1x64x256xf32>
    %90 = vector.shape_cast %89 : vector<1x64x256xf32> to vector<64x256xf32>
    %cst_72 = arith.constant 1.000000e+00 : f32
    %91 = vector.broadcast %cst_72 : f32 to vector<64x256xf32>
    %92 = arith.subf %91, %85 : vector<64x256xf32>
    %93 = arith.mulf %90, %92 : vector<64x256xf32>
    %94 = arith.addf %88, %93 : vector<64x256xf32>
    %c0_73 = arith.constant 0 : index
    %c0_74 = arith.constant 0 : index
    %c0_75 = arith.constant 0 : index
    %95 = vector.load %arg8[%c0_73, %c0_74, %c0_75] : memref<1x64x256xf32, #tpu.memory_space<vmem>>, vector<1x64x256xf32>
    %96 = vector.shape_cast %95 : vector<1x64x256xf32> to vector<64x256xf32>
    %97 = vector.shape_cast %94 : vector<64x256xf32> to vector<1x64x256xf32>
    tpu.vector_store %arg8[%c0_73, %c0_74, %c0_75], %97 {strides = array<i32>} : memref<1x64x256xf32, #tpu.memory_space<vmem>>, vector<1x64x256xf32>,
    return
  }
  func.func @transform_0(%arg0: i32) -> (i32, i32, i32) {
    %c0_i32 = arith.constant 0 : i32
    %c0_i32_0 = arith.constant 0 : i32
    %c0_i32_1 = arith.constant 0 : i32
    return %arg0, %c0_i32, %c0_i32_0 : i32, i32, i32
  }
  func.func @transform_1(%arg0: i32) -> (i32, i32, i32) {
    %c0_i32 = arith.constant 0 : i32
    %c0_i32_0 = arith.constant 0 : i32
    %c0_i32_1 = arith.constant 0 : i32
    return %arg0, %c0_i32, %c0_i32_0 : i32, i32, i32
  }
  func.func @transform_2(%arg0: i32) -> (i32, i32) {
    %c0_i32 = arith.constant 0 : i32
    %c0_i32_0 = arith.constant 0 : i32
    %c0_i32_1 = arith.constant 0 : i32
    return %c0_i32, %c0_i32_0 : i32, i32
  }
  func.func @transform_3(%arg0: i32) -> (i32, i32) {
    %c0_i32 = arith.constant 0 : i32
    %c0_i32_0 = arith.constant 0 : i32
    %c0_i32_1 = arith.constant 0 : i32
    return %c0_i32, %c0_i32_0 : i32, i32
  }
  func.func @transform_4(%arg0: i32) -> (i32, i32) {
    %c0_i32 = arith.constant 0 : i32
    %c0_i32_0 = arith.constant 0 : i32
    %c0_i32_1 = arith.constant 0 : i32
    return %c0_i32, %c0_i32_0 : i32, i32
  }
  func.func @transform_5(%arg0: i32) -> (i32, i32) {
    %c0_i32 = arith.constant 0 : i32
    %c0_i32_0 = arith.constant 0 : i32
    %c0_i32_1 = arith.constant 0 : i32
    return %c0_i32, %c0_i32_0 : i32, i32
  }
  func.func @transform_6(%arg0: i32) -> (i32, i32) {
    %c0_i32 = arith.constant 0 : i32
    %c0_i32_0 = arith.constant 0 : i32
    %c0_i32_1 = arith.constant 0 : i32
    return %c0_i32, %c0_i32_0 : i32, i32
  }
  func.func @transform_7(%arg0: i32) -> (i32, i32, i32) {
    %c0_i32 = arith.constant 0 : i32
    %c0_i32_0 = arith.constant 0 : i32
    %c0_i32_1 = arith.constant 0 : i32
    return %arg0, %c0_i32, %c0_i32_0 : i32, i32, i32
  }
}

</mosaic_0001>

<llo_original>
// kernel: tpu_custom_call.1
$region0: #{tpu_custom_call.1}
  #allocation0 [shape = 'u32[]', space=smem, size = 0x4, offset = 0x4, fixed_abs, tag = 'smem constant byte address 0x4 - core index']
  #allocation1 [shape = 'u32[144,128]{1,0:T(1,128)}', space=vmem, size = 0x12000, scoped, tag = 'internal scratch']
  %s0 = inlined_call_operand.vmem [shape: f32[2,64,256], index: 0, kind: input, shape index: {}]
  %s1 = inlined_call_operand.hbm [shape: f32[2,64,256], index: 1, kind: input, shape index: {}]
  %s2 = inlined_call_operand.vmem [shape: f32[48,64], index: 2, kind: input, shape index: {}]
  %s3 = inlined_call_operand.vmem [shape: f32[192,16], index: 3, kind: input, shape index: {}]
  %s4 = inlined_call_operand.vmem [shape: f32[240,1], index: 4, kind: input, shape index: {}]
  %s5 = inlined_call_operand.hbm [shape: f32[256,128], index: 5, kind: input, shape index: {}]
  %s6 = inlined_call_operand.hbm [shape: f32[128,256], index: 6, kind: input, shape index: {}]
  %s7 = inlined_call_operand.hbm [shape: f32[2,64,256], index: 7, kind: output, shape index: {}]
  %s8 = sld [smem:[#allocation0]]
  $region73: #{tpu_custom_call.1} parent=0
    _
  %s10 = ssub.s32 1, %s8
  %s11 = scalar_select 0, %s10, %s8
  $region1: #{tpu_custom_call.1} parent=0
    #allocation2 [shape = 'u8[131072]{0}', space=vmem, size = 0x20000, scoped, tag = 'input window, operand 1']
    #allocation3 [shape = 's32[2]{0}', space=sflag, size = 0x8, scoped, tag = 'scoped memory for tpu_custom_call.1']
    #allocation4 [shape = 's32[2]{0}', space=sflag, size = 0x8, scoped, tag = 'scoped memory for tpu_custom_call.1']
    #allocation5 [shape = 'u8[131072]{0}', space=vmem, size = 0x20000, scoped, tag = 'input window, operand 5, single buffered']
    #allocation6 [shape = 's32[1]{0}', space=sflag, size = 0x4, scoped, tag = 'scoped memory for tpu_custom_call.1']
    #allocation7 [shape = 'u8[131072]{0}', space=vmem, size = 0x20000, scoped, tag = 'input window, operand 6, single buffered']
    #allocation8 [shape = 'u8[131072]{0}', space=vmem, size = 0x20000, scoped, tag = 'output window, operand 0']
    %12 = vsyncpa [#allocation3], 0
    %s13 = scalar_lea.sflag [#allocation3], 1
    %14 = vsyncpa %s13, 0
    %15 = vsyncpa [#allocation6], 0
    %16 = vsyncpa [#allocation4], 0
    %s17 = scalar_lea.sflag [#allocation4], 1
    %18 = vsyncpa %s17, 0
    loop: start=0, step=1, limit=4
    $region2: #{tpu_custom_call.1} parent=1 // loop_pre_header
      _
    $region3: #{tpu_custom_call.1} parent=1 // loop_header
      %s20 = sphi 0, %s24
      %p21 = scmp.ge.s32.totalorder %s20, 4
      %s30 = sphi 0, %s32
      %s33 = sphi 0, %s30
      %s34 = sphi 0, %s33
      %s50 = sphi 0, %s34
      %s56 = sphi 0, %s58
      %s59 = sphi 0, %s56
      %s60 = sphi 0, %s59
      %s76 = sphi 0, %s60
      %s80 = sphi 0, %s80
      %s82 = sphi 0, %s80
      %s83 = sphi 0, %s82
      %s97 = sphi 0, %s83
      %s101 = sphi 0, %s101
      %s103 = sphi 0, %s101
      %s104 = sphi 0, %s103
      %s118 = sphi 0, %s104
      %s122 = sphi 0, %s122
      %s124 = sphi 0, %s122
      %s125 = sphi 0, %s124
      %s139 = sphi 0, %s125
      %s143 = sphi 0, %s143
      %s145 = sphi 0, %s143
      %s146 = sphi 0, %s145
      %s160 = sphi 0, %s146
      %s164 = sphi 0, %s164
      %s166 = sphi 0, %s164
      %s167 = sphi 0, %s166
      %s181 = sphi 0, %s167
      %s187 = sphi 0, %s189
      %s190 = sphi 0, %s187
      %s191 = sphi 0, %s190
      %s207 = sphi 0, %s191
    $region4: #{tpu_custom_call.1} parent=1 // loop_header_branch
      %23 = sbr.rel (%p21) target = $region8
    $region5: #{tpu_custom_call.1} parent=1 // loop_body
      %s25 = ssub.s32 %s20, 1
      %s26 = ssub.s32 %s20, 2
      %s27 = sadd.s32 %s20, 1
      %s28 = ssub.s32 %s20, %s27
      %p29 = scmp.eq.s32.totalorder %s28, 0
      %s31 = sadd.s32 %s30, 1
      %s32 = scalar_select %p29, %s30, %s31
      %p35 = pneg %p29
      %p36 = scmp.eq.s32.totalorder %s20, 1
      %p37 = por %p35, %p36
      %p38 = scmp.ne.s32.totalorder %s30, %s33
      %p39 = scmp.eq.s32.totalorder %s20, 0
      %p40 = por %p38, %p39
      %p41 = scmp.ne.s32.totalorder %s30, %s33
      %p42 = scmp.eq.s32.totalorder %s25, 1
      %p43 = por %p41, %p42
      %p44 = scmp.ne.s32.totalorder %s33, %s34
      %p45 = scmp.eq.s32.totalorder %s25, 0
      %p46 = por %p44, %p45
      %p47 = scmp.ne.s32.totalorder %s33, %s34
      %p48 = scmp.eq.s32.totalorder %s26, 1
      %p49 = por %p47, %p48
      %p51 = scmp.ne.s32.totalorder %s34, %s50
      %p52 = scmp.eq.s32.totalorder %s26, 0
      %p53 = por %p51, %p52
      %s54 = ssub.s32 %s20, %s27
      %p55 = scmp.eq.s32.totalorder %s54, 0
      %s57 = sadd.s32 %s56, 1
      %s58 = scalar_select %p55, %s56, %s57
      %p61 = pneg %p55
      %p62 = scmp.eq.s32.totalorder %s20, 1
      %p63 = por %p61, %p62
      %p64 = scmp.ne.s32.totalorder %s56, %s59
      %p65 = scmp.eq.s32.totalorder %s20, 0
      %p66 = por %p64, %p65
      %p67 = scmp.ne.s32.totalorder %s56, %s59
      %p68 = scmp.eq.s32.totalorder %s25, 1
      %p69 = por %p67, %p68
      %p70 = scmp.ne.s32.totalorder %s59, %s60
      %p71 = scmp.eq.s32.totalorder %s25, 0
      %p72 = por %p70, %p71
      %p73 = scmp.ne.s32.totalorder %s59, %s60
      %p74 = scmp.eq.s32.totalorder %s26, 1
      %p75 = por %p73, %p74
      %p77 = scmp.ne.s32.totalorder %s60, %s76
      %p78 = scmp.eq.s32.totalorder %s26, 0
      %p79 = por %p77, %p78
      %s81 = sadd.s32 %s80, 1
      %p84 = scmp.eq.s32.totalorder %s20, 1
      %p85 = scmp.ne.s32.totalorder %s80, %s82
      %p86 = scmp.eq.s32.totalorder %s20, 0
      %p87 = por %p85, %p86
      %p88 = scmp.ne.s32.totalorder %s80, %s82
      %p89 = scmp.eq.s32.totalorder %s25, 1
      %p90 = por %p88, %p89
      %p91 = scmp.ne.s32.totalorder %s82, %s83
      %p92 = scmp.eq.s32.totalorder %s25, 0
      %p93 = por %p91, %p92
      %p94 = scmp.ne.s32.totalorder %s82, %s83
      %p95 = scmp.eq.s32.totalorder %s26, 1
      %p96 = por %p94, %p95
      %p98 = scmp.ne.s32.totalorder %s83, %s97
      %p99 = scmp.eq.s32.totalorder %s26, 0
      %p100 = por %p98, %p99
      %s102 = sadd.s32 %s101, 1
      %p105 = scmp.eq.s32.totalorder %s20, 1
      %p106 = scmp.ne.s32.totalorder %s101, %s103
      %p107 = scmp.eq.s32.totalorder %s20, 0
      %p108 = por %p106, %p107
      %p109 = scmp.ne.s32.totalorder %s101, %s103
      %p110 = scmp.eq.s32.totalorder %s25, 1
      %p111 = por %p109, %p110
      %p112 = scmp.ne.s32.totalorder %s103, %s104
      %p113 = scmp.eq.s32.totalorder %s25, 0
      %p114 = por %p112, %p113
      %p115 = scmp.ne.s32.totalorder %s103, %s104
      %p116 = scmp.eq.s32.totalorder %s26, 1
      %p117 = por %p115, %p116
      %p119 = scmp.ne.s32.totalorder %s104, %s118
      %p120 = scmp.eq.s32.totalorder %s26, 0
      %p121 = por %p119, %p120
      %s123 = sadd.s32 %s122, 1
      %p126 = scmp.eq.s32.totalorder %s20, 1
      %p127 = scmp.ne.s32.totalorder %s122, %s124
      %p128 = scmp.eq.s32.totalorder %s20, 0
      %p129 = por %p127, %p128
      %p130 = scmp.ne.s32.totalorder %s122, %s124
      %p131 = scmp.eq.s32.totalorder %s25, 1
      %p132 = por %p130, %p131
      %p133 = scmp.ne.s32.totalorder %s124, %s125
      %p134 = scmp.eq.s32.totalorder %s25, 0
      %p135 = por %p133, %p134
      %p136 = scmp.ne.s32.totalorder %s124, %s125
      %p137 = scmp.eq.s32.totalorder %s26, 1
      %p138 = por %p136, %p137
      %p140 = scmp.ne.s32.totalorder %s125, %s139
      %p141 = scmp.eq.s32.totalorder %s26, 0
      %p142 = por %p140, %p141
      %s144 = sadd.s32 %s143, 1
      %p147 = scmp.eq.s32.totalorder %s20, 1
      %p148 = scmp.ne.s32.totalorder %s143, %s145
      %p149 = scmp.eq.s32.totalorder %s20, 0
      %p150 = por %p148, %p149
      %p151 = scmp.ne.s32.totalorder %s143, %s145
      %p152 = scmp.eq.s32.totalorder %s25, 1
      %p153 = por %p151, %p152
      %p154 = scmp.ne.s32.totalorder %s145, %s146
      %p155 = scmp.eq.s32.totalorder %s25, 0
      %p156 = por %p154, %p155
      %p157 = scmp.ne.s32.totalorder %s145, %s146
      %p158 = scmp.eq.s32.totalorder %s26, 1
      %p159 = por %p157, %p158
      %p161 = scmp.ne.s32.totalorder %s146, %s160
      %p162 = scmp.eq.s32.totalorder %s26, 0
      %p163 = por %p161, %p162
      %s165 = sadd.s32 %s164, 1
      %p168 = scmp.eq.s32.totalorder %s20, 1
      %p169 = scmp.ne.s32.totalorder %s164, %s166
      %p170 = scmp.eq.s32.totalorder %s20, 0
      %p171 = por %p169, %p170
      %p172 = scmp.ne.s32.totalorder %s164, %s166
      %p173 = scmp.eq.s32.totalorder %s25, 1
      %p174 = por %p172, %p173
      %p175 = scmp.ne.s32.totalorder %s166, %s167
      %p176 = scmp.eq.s32.totalorder %s25, 0
      %p177 = por %p175, %p176
      %p178 = scmp.ne.s32.totalorder %s166, %s167
      %p179 = scmp.eq.s32.totalorder %s26, 1
      %p180 = por %p178, %p179
      %p182 = scmp.ne.s32.totalorder %s167, %s181
      %p183 = scmp.eq.s32.totalorder %s26, 0
      %p184 = por %p182, %p183
      %s185 = ssub.s32 %s20, %s27
      %p186 = scmp.eq.s32.totalorder %s185, 0
      %s188 = sadd.s32 %s187, 1
      %s189 = scalar_select %p186, %s187, %s188
      %p192 = pneg %p186
      %p193 = scmp.eq.s32.totalorder %s20, 1
      %p194 = por %p192, %p193
      %p195 = scmp.ne.s32.totalorder %s187, %s190
      %p196 = scmp.eq.s32.totalorder %s20, 0
      %p197 = por %p195, %p196
      %p198 = scmp.ne.s32.totalorder %s187, %s190
      %p199 = scmp.eq.s32.totalorder %s25, 1
      %p200 = por %p198, %p199
      %p201 = scmp.ne.s32.totalorder %s190, %s191
      %p202 = scmp.eq.s32.totalorder %s25, 0
      %p203 = por %p201, %p202
      %p204 = scmp.ne.s32.totalorder %s190, %s191
      %p205 = scmp.eq.s32.totalorder %s26, 1
      %p206 = por %p204, %p205
      %p208 = scmp.ne.s32.totalorder %s191, %s207
      %p209 = scmp.eq.s32.totalorder %s26, 0
      %p210 = por %p208, %p209
      %p211 = scmp.le.s32.totalorder 1, %s20
      %p212 = scmp.lt.s32.totalorder %s20, 3
      %p213 = pnand %p211, %p212
      %p214 = pneg %p213
      // Predicated region
      $region9: #{tpu_custom_call.1} parent=5 // pred_check
        _
      $region10: #{tpu_custom_call.1} parent=5 // pred_check_branch
        %216 = sbr.rel (%p213) target = $region12
      $region11: #{tpu_custom_call.1} parent=5 // pred_region
        %s217 = ssub.s32 %s20, 1
        // Predicated region
        $region13: #{tpu_custom_call.1} parent=11 // pred_check
          %p218 = pneg %p93
        $region14: #{tpu_custom_call.1} parent=11 // pred_check_branch
          %220 = sbr.rel (%p218) target = $region16
        $region15: #{tpu_custom_call.1} parent=11 // pred_region
          _
        $region16: #{tpu_custom_call.1} parent=11 // pred_fallthru
          _
        // Predicated region
        $region17: #{tpu_custom_call.1} parent=11 // pred_check
          %p221 = pneg %p114
        $region18: #{tpu_custom_call.1} parent=11 // pred_check_branch
          %223 = sbr.rel (%p221) target = $region20
        $region19: #{tpu_custom_call.1} parent=11 // pred_region
          _
        $region20: #{tpu_custom_call.1} parent=11 // pred_fallthru
          _
        // Predicated region
        $region21: #{tpu_custom_call.1} parent=11 // pred_check
          %p224 = pneg %p135
        $region22: #{tpu_custom_call.1} parent=11 // pred_check_branch
          %226 = sbr.rel (%p224) target = $region24
        $region23: #{tpu_custom_call.1} parent=11 // pred_region
          _
        $region24: #{tpu_custom_call.1} parent=11 // pred_fallthru
          _
        // Predicated region
        $region25: #{tpu_custom_call.1} parent=11 // pred_check
          %p227 = pneg %p156
        $region26: #{tpu_custom_call.1} parent=11 // pred_check_branch
          %229 = sbr.rel (%p227) target = $region28
        $region27: #{tpu_custom_call.1} parent=11 // pred_region
          %s231 = ssub.s32 4096, 4096
          %232 = vsyncadd [#allocation6], %s231
          %s233 = sshll.u32 [#allocation5], 4
          %s234 = int_to_ptr.vmem [resolvable:$true] %s233
          %239 = dma.hbm_to_vmem [thread:$0]  %s5, 4096, %s234, [#allocation6], 128, 128, 8
        $region28: #{tpu_custom_call.1} parent=11 // pred_fallthru
          _
        // Predicated region
        $region29: #{tpu_custom_call.1} parent=11 // pred_check
          %p240 = pneg %p177
        $region30: #{tpu_custom_call.1} parent=11 // pred_check_branch
          %242 = sbr.rel (%p240) target = $region32
        $region31: #{tpu_custom_call.1} parent=11 // pred_region
          %s244 = ssub.s32 4096, 4096
          %245 = vsyncadd [#allocation6], %s244
          %s246 = sshll.u32 [#allocation7], 4
          %s247 = int_to_ptr.vmem [resolvable:$true] %s246
          %252 = dma.hbm_to_vmem [thread:$0]  %s6, 4096, %s247, [#allocation6], 256, 256, 16
        $region32: #{tpu_custom_call.1} parent=11 // pred_fallthru
          _
      $region12: #{tpu_custom_call.1} parent=5 // pred_fallthru
        _
      %p253 = scmp.lt.s32.totalorder %s20, 2
      // Predicated region
      $region33: #{tpu_custom_call.1} parent=5 // pred_check
        %p254 = pneg %p253
      $region34: #{tpu_custom_call.1} parent=5 // pred_check_branch
        %256 = sbr.rel (%p254) target = $region36
      $region35: #{tpu_custom_call.1} parent=5 // pred_region
        // Predicated region
        $region37: #{tpu_custom_call.1} parent=35 // pred_check
          %p257 = pneg %p40
        $region38: #{tpu_custom_call.1} parent=35 // pred_check_branch
          %259 = sbr.rel (%p257) target = $region40
        $region39: #{tpu_custom_call.1} parent=35 // pred_region
          %p260 = scmp.lt.s32.totalorder %s20, 1
          %s261 = scalar_select %p260, %s20, 1
          %s262 = smul.addr %s261, 16
          %s263 = smul.addr %s262, 8
          %s264 = scalar_lea.vmem %s0, %s263
        $region40: #{tpu_custom_call.1} parent=35 // pred_fallthru
          _
        // Predicated region
        $region41: #{tpu_custom_call.1} parent=35 // pred_check
          %p265 = pneg %p66
        $region42: #{tpu_custom_call.1} parent=35 // pred_check_branch
          %267 = sbr.rel (%p265) target = $region44
        $region43: #{tpu_custom_call.1} parent=35 // pred_region
          %s268 = sand.u32 %s56, 1
          %s269 = scalar_lea.sflag [#allocation3], %s268
          %s270 = sand.u32 %s56, 1
          %s271 = smul.addr %s270, 128
          %s272 = scalar_lea.vmem [#allocation2], %s271
          %s274 = ssub.s32 2048, 2048
          %275 = vsyncadd %s269, %s274
          %s276 = smul.addr %s20, 16
          %s277 = smul.addr %s276, 128
          %s278 = scalar_lea.hbm %s1, %s277
          %s279 = sshll.u32 %s272, 4
          %s280 = int_to_ptr.vmem [resolvable:$true] %s279
          %285 = dma.hbm_to_vmem [thread:$0]  %s278, 2048, %s280, %s269, 256, 256, 16
        $region44: #{tpu_custom_call.1} parent=35 // pred_fallthru
          _
      $region36: #{tpu_custom_call.1} parent=5 // pred_fallthru
        _
      %p286 = scmp.le.s32.totalorder 1, %s20
      %p287 = scmp.lt.s32.totalorder %s20, 3
      %p288 = pnand %p286, %p287
      %p289 = pneg %p288
      // Predicated region
      $region45: #{tpu_custom_call.1} parent=5 // pred_check
        _
      $region46: #{tpu_custom_call.1} parent=5 // pred_check_branch
        %291 = sbr.rel (%p288) target = $region48
      $region47: #{tpu_custom_call.1} parent=5 // pred_region
        %s292 = ssub.s32 %s20, 1
        %s293 = sand.u32 %s59, 1
        %s294 = scalar_lea.sflag [#allocation3], %s293
        %s295 = sand.u32 %s59, 1
        %s296 = smul.addr %s295, 128
        %s297 = scalar_lea.vmem [#allocation2], %s296
        // Predicated region
        $region49: #{tpu_custom_call.1} parent=47 // pred_check
          %p298 = pneg %p72
        $region50: #{tpu_custom_call.1} parent=47 // pred_check_branch
          %300 = sbr.rel (%p298) target = $region52
        $region51: #{tpu_custom_call.1} parent=47 // pred_region
          %301 = dma.done %s294, 2048
        $region52: #{tpu_custom_call.1} parent=47 // pred_fallthru
          _
        // Predicated region
        $region53: #{tpu_custom_call.1} parent=47 // pred_check
          %p302 = pneg %p156
        $region54: #{tpu_custom_call.1} parent=47 // pred_check_branch
          %304 = sbr.rel (%p302) target = $region56
        $region55: #{tpu_custom_call.1} parent=47 // pred_region
          %305 = dma.done [#allocation6], 4096
        $region56: #{tpu_custom_call.1} parent=47 // pred_fallthru
          _
        // Predicated region
        $region57: #{tpu_custom_call.1} parent=47 // pred_check
          %p306 = pneg %p177
        $region58: #{tpu_custom_call.1} parent=47 // pred_check_branch
          %308 = sbr.rel (%p306) target = $region60
        $region59: #{tpu_custom_call.1} parent=47 // pred_region
          %309 = dma.done [#allocation6], 4096
        $region60: #{tpu_custom_call.1} parent=47 // pred_fallthru
          _
        %p310 = scmp.lt.s32.totalorder %s25, 1
        %s311 = scalar_select %p310, %s25, 1
        %s312 = smul.addr %s311, 16
        %s313 = smul.addr %s312, 8
        %s314 = scalar_lea.vmem %s0, %s313
        %p315 = pneg %p46
        %p316 = pneg %p43
        %s317 = sand.u32 %s59, 1
        %s318 = scalar_lea.sflag [#allocation3], %s317
        %s319 = sand.u32 %s59, 1
        %s320 = smul.addr %s319, 128
        %s321 = scalar_lea.vmem [#allocation2], %s320
        %p322 = pneg %p72
        %p323 = pneg %p69
        %p324 = pneg %p93
        %p325 = pneg %p90
        %p326 = pneg %p114
        %p327 = pneg %p111
        %p328 = pneg %p135
        %p329 = pneg %p132
        %p330 = pneg %p156
        %p331 = pneg %p153
        %p332 = pneg %p177
        %p333 = pneg %p174
        %p334 = pneg %p203
        %p335 = pneg %p200
        %s336 = sand.u32 %s190, 1
        %s337 = scalar_lea.sflag [#allocation4], %s336
        %s338 = sand.u32 %s190, 1
        %s339 = smul.addr %s338, 128
        %s340 = scalar_lea.vmem [#allocation8], %s339
        %p341 = scmp.lt.s32.totalorder %s25, 1
        %s342 = scalar_select %p341, %s25, 1
        %s343 = smul.addr %s342, 16
        %s344 = smul.addr %s343, 8
        %s345 = scalar_lea.vmem %s0, %s344
        %v346 = vld [vmem:[%s345] sm:$0xff]
        %v347 = vld [vmem:[%s345 + $0x8] sm:$0xff]
        %v348 = vld [vmem:[%s345 + $0x10] sm:$0xff]
        %v349 = vld [vmem:[%s345 + $0x18] sm:$0xff]
        %v350 = vld [vmem:[%s345 + $0x20] sm:$0xff]
        %v351 = vld [vmem:[%s345 + $0x28] sm:$0xff]
        %v352 = vld [vmem:[%s345 + $0x30] sm:$0xff]
        %v353 = vld [vmem:[%s345 + $0x38] sm:$0xff]
        %v354 = vld [vmem:[%s345 + $0x40] sm:$0xff]
        %v355 = vld [vmem:[%s345 + $0x48] sm:$0xff]
        %v356 = vld [vmem:[%s345 + $0x50] sm:$0xff]
        %v357 = vld [vmem:[%s345 + $0x58] sm:$0xff]
        %v358 = vld [vmem:[%s345 + $0x60] sm:$0xff]
        %v359 = vld [vmem:[%s345 + $0x68] sm:$0xff]
        %v360 = vld [vmem:[%s345 + $0x70] sm:$0xff]
        %v361 = vld [vmem:[%s345 + $0x78] sm:$0xff]
        %v362 = vld [vmem:[%s297] sm:$0xff]
        %v363 = vld [vmem:[%s297 + $0x8] sm:$0xff]
        %v364 = vld [vmem:[%s297 + $0x10] sm:$0xff]
        %v365 = vld [vmem:[%s297 + $0x18] sm:$0xff]
        %v366 = vld [vmem:[%s297 + $0x20] sm:$0xff]
        %v367 = vld [vmem:[%s297 + $0x28] sm:$0xff]
        %v368 = vld [vmem:[%s297 + $0x30] sm:$0xff]
        %v369 = vld [vmem:[%s297 + $0x38] sm:$0xff]
        %v370 = vld [vmem:[%s297 + $0x40] sm:$0xff]
        %v371 = vld [vmem:[%s297 + $0x48] sm:$0xff]
        %v372 = vld [vmem:[%s297 + $0x50] sm:$0xff]
        %v373 = vld [vmem:[%s297 + $0x58] sm:$0xff]
        %v374 = vld [vmem:[%s297 + $0x60] sm:$0xff]
        %v375 = vld [vmem:[%s297 + $0x68] sm:$0xff]
        %v376 = vld [vmem:[%s297 + $0x70] sm:$0xff]
        %v377 = vld [vmem:[%s297 + $0x78] sm:$0xff]
        %v378 = vadd.f32 %v346, %v362
        %v379 = vadd.f32 %v347, %v363
        %v380 = vadd.f32 %v348, %v364
        %v381 = vadd.f32 %v349, %v365
        %v382 = vadd.f32 %v350, %v366
        %v383 = vadd.f32 %v351, %v367
        %v384 = vadd.f32 %v352, %v368
        %v385 = vadd.f32 %v353, %v369
        %v386 = vadd.f32 %v354, %v370
        %v387 = vadd.f32 %v355, %v371
        %v388 = vadd.f32 %v356, %v372
        %v389 = vadd.f32 %v357, %v373
        %v390 = vadd.f32 %v358, %v374
        %v391 = vadd.f32 %v359, %v375
        %v392 = vadd.f32 %v360, %v376
        %v393 = vadd.f32 %v361, %v377
        %v394 = vld [vmem:[%s2] sm:$0xff]
        %v395 = vld [vmem:[%s2 + $0x8] sm:$0xff]
        %v396 = vld [vmem:[%s4] sm:$0xff]
        %v397 = vld [vmem:[%s4 + $0x8] sm:$0xff]
        %v398 = vld [vmem:[%s3] sm:$0xff]
        %v399 = vld [vmem:[%s3 + $0x8] sm:$0xff]
        %v400 = vld [vmem:[%s3 + $0x10] sm:$0xff]
        %v401 = vld [vmem:[%s3 + $0x18] sm:$0xff]
        %v402 = vld [vmem:[%s3 + $0x20] sm:$0xff]
        %v403 = vld [vmem:[%s3 + $0x28] sm:$0xff]
        %v404 = vld [vmem:[%s3 + $0x30] sm:$0xff]
        %v405 = vld [vmem:[%s3 + $0x38] sm:$0xff]
        %v406 = vld [vmem:[%s4 + $0x30] sm:$0xff]
        %v407 = vld [vmem:[%s4 + $0x38] sm:$0xff]
        %v408 = vld [vmem:[%s4 + $0x40] sm:$0xff]
        %v409 = vld [vmem:[%s4 + $0x48] sm:$0xff]
        %v410 = vld [vmem:[%s4 + $0x50] sm:$0xff]
        %v411 = vld [vmem:[%s4 + $0x58] sm:$0xff]
        %v412 = vld [vmem:[%s4 + $0x60] sm:$0xff]
        %v413 = vld [vmem:[%s4 + $0x68] sm:$0xff]
        %415 = vset.pattern.permute.xlu0 0
        %416 = vperm.xlu0 %415, %v396
        %v417 = vpop.permute.xlu0 %416
        %420 = vset.pattern.permute.xlu0 0
        %421 = vperm.xlu0 %420, %v397
        %v422 = vpop.permute.xlu0 %421
        %vm424 = vcmask 523264
        %v426 = vsel %vm424, %v394, 0
        %v429 = vsel %vm424, %v395, 0
        %431 = vmatprep.subr.mxu0 0.0
        %432 = vmatpush1.msra.mxu0 0.0
        %433 = vmatprep.subr.mxu0 0.0
        %434 = vmatpush1.msra.mxu0 0.0
        %435 = vmatprep.subr.mxu0 0.0
        %436 = vmatpush1.msra.mxu0 0.0
        %437 = vmatprep.subr.mxu0 0.0
        %438 = vmatpush1.msra.mxu0 0.0
        %439 = vmatprep.subr.mxu0 0.0
        %440 = vmatpush1.msra.mxu0 0.0
        %441 = vmatprep.subr.mxu0 0.0
        %442 = vmatpush1.msra.mxu0 0.0
        %443 = vmatprep.subr.mxu0 0.0
        %444 = vmatpush1.msra.mxu0 0.0
        %445 = vmatprep.subr.mxu0 0.0
        %446 = vmatpush1.msra.mxu0 0.0
        %447 = vmatprep.subr.mxu0 %v393
        %448 = vmatpush1.msra.mxu0 %v392
        %449 = vmatprep.subr.mxu0 %v391
        %450 = vmatpush1.msra.mxu0 %v390
        %451 = vmatprep.subr.mxu0 %v389
        %452 = vmatpush1.msra.mxu0 %v388
        %453 = vmatprep.subr.mxu0 %v387
        %454 = vmatpush1.msra.mxu0 %v386
        %455 = vmatprep.subr.mxu0 %v385
        %456 = vmatpush1.msra.mxu0 %v384
        %457 = vmatprep.subr.mxu0 %v383
        %458 = vmatpush1.msra.mxu0 %v382
        %459 = vmatprep.subr.mxu0 %v381
        %460 = vmatpush1.msra.mxu0 %v380
        %461 = vmatprep.subr.mxu0 %v379
        %462 = vmatpush1.msra.mxu0 %v378
        %463 = vmatprep.subr.mxu0 0.0
        %464 = vmatpush2.msra.mxu0 0.0
        %465 = vmatprep.subr.mxu0 0.0
        %466 = vmatpush2.msra.mxu0 0.0
        %467 = vmatprep.subr.mxu0 0.0
        %468 = vmatpush2.msra.mxu0 0.0
        %469 = vmatprep.subr.mxu0 0.0
        %470 = vmatpush2.msra.mxu0 0.0
        %471 = vmatprep.subr.mxu0 0.0
        %472 = vmatpush2.msra.mxu0 0.0
        %473 = vmatprep.subr.mxu0 0.0
        %474 = vmatpush2.msra.mxu0 0.0
        %475 = vmatprep.subr.mxu0 0.0
        %476 = vmatpush2.msra.mxu0 0.0
        %477 = vmatprep.subr.mxu0 0.0
        %478 = vmatpush2.msra.mxu0 0.0
        %479 = vmatprep.subr.mxu0 0.0
        %480 = vmatpush2.msra.mxu0 0.0
        %481 = vmatprep.subr.mxu0 0.0
        %482 = vmatpush2.msra.mxu0 0.0
        %483 = vmatprep.subr.mxu0 0.0
        %484 = vmatpush2.msra.mxu0 0.0
        %485 = vmatprep.subr.mxu0 0.0
        %486 = vmatpush2.msra.mxu0 0.0
        %487 = vmatprep.subr.mxu0 0.0
        %488 = vmatpush2.msra.mxu0 0.0
        %489 = vmatprep.subr.mxu0 0.0
        %490 = vmatpush2.msra.mxu0 0.0
        %491 = vmatprep.subr.mxu0 0.0
        %492 = vmatpush2.msra.mxu0 0.0
        %493 = vmatprep.subr.mxu0 0.0
        %494 = vmatpush2.msra.mxu0 0.0
        %495 = vmatprep.mubr.f32.mxu0 0.0
        %496 = vmatmul.mubr.f32.gmra.mxu0 %v426
        %v497 = vpop.f32.mrf.mxu0
        %v498 = vadd.f32 %v417, %v497
        %v499 = vpop.f32.mrf.mxu0
        %v500 = vadd.f32 %v417, %v499
        %501 = vmatprep.mubr.f32.mxu0 0.0
        %502 = vmatmul.mubr.f32.gmra.mxu0 %v429
        %v503 = vpop.f32.mrf.mxu0
        %v504 = vadd.f32 %v422, %v503
        %v505 = vpop.f32.mrf.mxu0
        %v506 = vadd.f32 %v422, %v505
        %507 = vdwg.mxu0
        %v508 = vmax.f32 %v498, 0.0
        %v509 = vmax.f32 %v500, 0.0
        %v510 = vmax.f32 %v504, 0.0
        %v511 = vmax.f32 %v506, 0.0
        %513 = vset.pattern.permute.xlu0 0
        %514 = vperm.xlu0 %513, %v406
        %v515 = vpop.permute.xlu0 %514
        %518 = vset.pattern.permute.xlu0 0
        %519 = vperm.xlu0 %518, %v407
        %v520 = vpop.permute.xlu0 %519
        %523 = vset.pattern.permute.xlu0 0
        %524 = vperm.xlu0 %523, %v408
        %v525 = vpop.permute.xlu0 %524
        %528 = vset.pattern.permute.xlu0 0
        %529 = vperm.xlu0 %528, %v409
        %v530 = vpop.permute.xlu0 %529
        %533 = vset.pattern.permute.xlu0 0
        %534 = vperm.xlu0 %533, %v410
        %v535 = vpop.permute.xlu0 %534
        %538 = vset.pattern.permute.xlu0 0
        %539 = vperm.xlu0 %538, %v411
        %v540 = vpop.permute.xlu0 %539
        %543 = vset.pattern.permute.xlu0 0
        %544 = vperm.xlu0 %543, %v412
        %v545 = vpop.permute.xlu0 %544
        %548 = vset.pattern.permute.xlu0 0
        %549 = vperm.xlu0 %548, %v413
        %v550 = vpop.permute.xlu0 %549
        %vm552 = vcmask 130048
        %v554 = vsel %vm552, %v398, 0
        %v557 = vsel %vm552, %v399, 0
        %v560 = vsel %vm552, %v400, 0
        %v563 = vsel %vm552, %v401, 0
        %v566 = vsel %vm552, %v402, 0
        %v569 = vsel %vm552, %v403, 0
        %v572 = vsel %vm552, %v404, 0
        %v575 = vsel %vm552, %v405, 0
        %577 = vmatprep.subr.mxu0 0.0
        %578 = vmatpush1.msra.mxu0 0.0
        %579 = vmatprep.subr.mxu0 0.0
        %580 = vmatpush1.msra.mxu0 0.0
        %581 = vmatprep.subr.mxu0 0.0
        %582 = vmatpush1.msra.mxu0 0.0
        %583 = vmatprep.subr.mxu0 0.0
        %584 = vmatpush1.msra.mxu0 0.0
        %585 = vmatprep.subr.mxu0 0.0
        %586 = vmatpush1.msra.mxu0 0.0
        %587 = vmatprep.subr.mxu0 0.0
        %588 = vmatpush1.msra.mxu0 0.0
        %589 = vmatprep.subr.mxu0 0.0
        %590 = vmatpush1.msra.mxu0 0.0
        %591 = vmatprep.subr.mxu0 0.0
        %592 = vmatpush1.msra.mxu0 0.0
        %593 = vmatprep.subr.mxu0 0.0
        %594 = vmatpush1.msra.mxu0 0.0
        %595 = vmatprep.subr.mxu0 0.0
        %596 = vmatpush1.msra.mxu0 0.0
        %597 = vmatprep.subr.mxu0 0.0
        %598 = vmatpush1.msra.mxu0 0.0
        %599 = vmatprep.subr.mxu0 0.0
        %600 = vmatpush1.msra.mxu0 0.0
        %601 = vmatprep.subr.mxu0 0.0
        %602 = vmatpush1.msra.mxu0 0.0
        %603 = vmatprep.subr.mxu0 0.0
        %604 = vmatpush1.msra.mxu0 0.0
        %605 = vmatprep.subr.mxu0 %v511
        %606 = vmatpush1.msra.mxu0 %v510
        %607 = vmatprep.subr.mxu0 %v509
        %608 = vmatpush1.msra.mxu0 %v508
        %609 = vmatprep.subr.mxu0 0.0
        %610 = vmatpush2.msra.mxu0 0.0
        %611 = vmatprep.subr.mxu0 0.0
        %612 = vmatpush2.msra.mxu0 0.0
        %613 = vmatprep.subr.mxu0 0.0
        %614 = vmatpush2.msra.mxu0 0.0
        %615 = vmatprep.subr.mxu0 0.0
        %616 = vmatpush2.msra.mxu0 0.0
        %617 = vmatprep.subr.mxu0 0.0
        %618 = vmatpush2.msra.mxu0 0.0
        %619 = vmatprep.subr.mxu0 0.0
        %620 = vmatpush2.msra.mxu0 0.0
        %621 = vmatprep.subr.mxu0 0.0
        %622 = vmatpush2.msra.mxu0 0.0
        %623 = vmatprep.subr.mxu0 0.0
        %624 = vmatpush2.msra.mxu0 0.0
        %625 = vmatprep.subr.mxu0 0.0
        %626 = vmatpush2.msra.mxu0 0.0
        %627 = vmatprep.subr.mxu0 0.0
        %628 = vmatpush2.msra.mxu0 0.0
        %629 = vmatprep.subr.mxu0 0.0
        %630 = vmatpush2.msra.mxu0 0.0
        %631 = vmatprep.subr.mxu0 0.0
        %632 = vmatpush2.msra.mxu0 0.0
        %633 = vmatprep.subr.mxu0 0.0
        %634 = vmatpush2.msra.mxu0 0.0
        %635 = vmatprep.subr.mxu0 0.0
        %636 = vmatpush2.msra.mxu0 0.0
        %637 = vmatprep.subr.mxu0 0.0
        %638 = vmatpush2.msra.mxu0 0.0
        %639 = vmatprep.subr.mxu0 0.0
        %640 = vmatpush2.msra.mxu0 0.0
        %641 = vmatprep.mubr.f32.mxu0 0.0
        %642 = vmatmul.mubr.f32.gmra.mxu0 %v554
        %v643 = vpop.f32.mrf.mxu0
        %v644 = vadd.f32 %v515, %v643
        %v645 = vpop.f32.mrf.mxu0
        %v646 = vadd.f32 %v515, %v645
        %647 = vmatprep.mubr.f32.mxu0 0.0
        %648 = vmatmul.mubr.f32.gmra.mxu0 %v557
        %v649 = vpop.f32.mrf.mxu0
        %v650 = vadd.f32 %v520, %v649
        %v651 = vpop.f32.mrf.mxu0
        %v652 = vadd.f32 %v520, %v651
        %653 = vmatprep.mubr.f32.mxu0 0.0
        %654 = vmatmul.mubr.f32.gmra.mxu0 %v560
        %v655 = vpop.f32.mrf.mxu0
        %v656 = vadd.f32 %v525, %v655
        %v657 = vpop.f32.mrf.mxu0
        %v658 = vadd.f32 %v525, %v657
        %659 = vmatprep.mubr.f32.mxu0 0.0
        %660 = vmatmul.mubr.f32.gmra.mxu0 %v563
        %v661 = vpop.f32.mrf.mxu0
        %v662 = vadd.f32 %v530, %v661
        %v663 = vpop.f32.mrf.mxu0
        %v664 = vadd.f32 %v530, %v663
        %665 = vmatprep.mubr.f32.mxu0 0.0
        %666 = vmatmul.mubr.f32.gmra.mxu0 %v566
        %v667 = vpop.f32.mrf.mxu0
        %v668 = vadd.f32 %v535, %v667
        %v669 = vpop.f32.mrf.mxu0
        %v670 = vadd.f32 %v535, %v669
        %671 = vmatprep.mubr.f32.mxu0 0.0
        %672 = vmatmul.mubr.f32.gmra.mxu0 %v569
        %v673 = vpop.f32.mrf.mxu0
        %v674 = vadd.f32 %v540, %v673
        %v675 = vpop.f32.mrf.mxu0
        %v676 = vadd.f32 %v540, %v675
        %677 = vmatprep.mubr.f32.mxu0 0.0
        %678 = vmatmul.mubr.f32.gmra.mxu0 %v572
        %v679 = vpop.f32.mrf.mxu0
        %v680 = vadd.f32 %v545, %v679
        %v681 = vpop.f32.mrf.mxu0
        %v682 = vadd.f32 %v545, %v681
        %683 = vmatprep.mubr.f32.mxu0 0.0
        %684 = vmatmul.mubr.f32.gmra.mxu0 %v575
        %v685 = vpop.f32.mrf.mxu0
        %v686 = vadd.f32 %v550, %v685
        %v687 = vpop.f32.mrf.mxu0
        %v688 = vadd.f32 %v550, %v687
        %689 = vdwg.mxu0
        %v690 = vld [vmem:[#allocation5] sm:$0xff]
        %v691 = vld [vmem:[#allocation5 + $0x8] sm:$0xff]
        %v692 = vld [vmem:[#allocation5 + $0x10] sm:$0xff]
        %v693 = vld [vmem:[#allocation5 + $0x18] sm:$0xff]
        %v694 = vld [vmem:[#allocation5 + $0x20] sm:$0xff]
        %v695 = vld [vmem:[#allocation5 + $0x28] sm:$0xff]
        %v696 = vld [vmem:[#allocation5 + $0x30] sm:$0xff]
        %v697 = vld [vmem:[#allocation5 + $0x38] sm:$0xff]
        %v698 = vld [vmem:[#allocation5 + $0x40] sm:$0xff]
        %v699 = vld [vmem:[#allocation5 + $0x48] sm:$0xff]
        %v700 = vld [vmem:[#allocation5 + $0x50] sm:$0xff]
        %v701 = vld [vmem:[#allocation5 + $0x58] sm:$0xff]
        %v702 = vld [vmem:[#allocation5 + $0x60] sm:$0xff]
        %v703 = vld [vmem:[#allocation5 + $0x68] sm:$0xff]
        %v704 = vld [vmem:[#allocation5 + $0x70] sm:$0xff]
        %v705 = vld [vmem:[#allocation5 + $0x78] sm:$0xff]
        %v706 = vld [vmem:[#allocation5 + $0x80] sm:$0xff]
        %v707 = vld [vmem:[#allocation5 + $0x88] sm:$0xff]
        %v708 = vld [vmem:[#allocation5 + $0x90] sm:$0xff]
        %v709 = vld [vmem:[#allocation5 + $0x98] sm:$0xff]
        %v710 = vld [vmem:[#allocation5 + $0xa0] sm:$0xff]
        %v711 = vld [vmem:[#allocation5 + $0xa8] sm:$0xff]
        %v712 = vld [vmem:[#allocation5 + $0xb0] sm:$0xff]
        %v713 = vld [vmem:[#allocation5 + $0xb8] sm:$0xff]
        %v714 = vld [vmem:[#allocation5 + $0xc0] sm:$0xff]
        %v715 = vld [vmem:[#allocation5 + $0xc8] sm:$0xff]
        %v716 = vld [vmem:[#allocation5 + $0xd0] sm:$0xff]
        %v717 = vld [vmem:[#allocation5 + $0xd8] sm:$0xff]
        %v718 = vld [vmem:[#allocation5 + $0xe0] sm:$0xff]
        %v719 = vld [vmem:[#allocation5 + $0xe8] sm:$0xff]
        %v720 = vld [vmem:[#allocation5 + $0xf0] sm:$0xff]
        %v721 = vld [vmem:[#allocation5 + $0xf8] sm:$0xff]
        %722 = vmatprep.subr.mxu0 0.0
        %723 = vmatpush1.msra.mxu0 %v705
        %724 = vmatprep.subr.mxu0 0.0
        %725 = vmatpush1.msra.mxu0 %v704
        %726 = vmatprep.subr.mxu0 0.0
        %727 = vmatpush1.msra.mxu0 %v703
        %728 = vmatprep.subr.mxu0 0.0
        %729 = vmatpush1.msra.mxu0 %v702
        %730 = vmatprep.subr.mxu0 0.0
        %731 = vmatpush1.msra.mxu0 %v701
        %732 = vmatprep.subr.mxu0 0.0
        %733 = vmatpush1.msra.mxu0 %v700
        %734 = vmatprep.subr.mxu0 0.0
        %735 = vmatpush1.msra.mxu0 %v699
        %736 = vmatprep.subr.mxu0 0.0
        %737 = vmatpush1.msra.mxu0 %v698
        %738 = vmatprep.subr.mxu0 0.0
        %739 = vmatpush1.msra.mxu0 %v697
        %740 = vmatprep.subr.mxu0 0.0
        %741 = vmatpush1.msra.mxu0 %v696
        %742 = vmatprep.subr.mxu0 0.0
        %743 = vmatpush1.msra.mxu0 %v695
        %744 = vmatprep.subr.mxu0 0.0
        %745 = vmatpush1.msra.mxu0 %v694
        %746 = vmatprep.subr.mxu0 0.0
        %747 = vmatpush1.msra.mxu0 %v693
        %748 = vmatprep.subr.mxu0 0.0
        %749 = vmatpush1.msra.mxu0 %v692
        %750 = vmatprep.subr.mxu0 0.0
        %751 = vmatpush1.msra.mxu0 %v691
        %752 = vmatprep.subr.mxu0 0.0
        %753 = vmatpush1.msra.mxu0 %v690
        %754 = vmatprep.subr.mxu0 0.0
        %755 = vmatpush2.msra.mxu0 %v721
        %756 = vmatprep.subr.mxu0 0.0
        %757 = vmatpush2.msra.mxu0 %v720
        %758 = vmatprep.subr.mxu0 0.0
        %759 = vmatpush2.msra.mxu0 %v719
        %760 = vmatprep.subr.mxu0 0.0
        %761 = vmatpush2.msra.mxu0 %v718
        %762 = vmatprep.subr.mxu0 0.0
        %763 = vmatpush2.msra.mxu0 %v717
        %764 = vmatprep.subr.mxu0 0.0
        %765 = vmatpush2.msra.mxu0 %v716
        %766 = vmatprep.subr.mxu0 0.0
        %767 = vmatpush2.msra.mxu0 %v715
        %768 = vmatprep.subr.mxu0 0.0
        %769 = vmatpush2.msra.mxu0 %v714
        %770 = vmatprep.subr.mxu0 0.0
        %771 = vmatpush2.msra.mxu0 %v713
        %772 = vmatprep.subr.mxu0 0.0
        %773 = vmatpush2.msra.mxu0 %v712
        %774 = vmatprep.subr.mxu0 0.0
        %775 = vmatpush2.msra.mxu0 %v711
        %776 = vmatprep.subr.mxu0 0.0
        %777 = vmatpush2.msra.mxu0 %v710
        %778 = vmatprep.subr.mxu0 0.0
        %779 = vmatpush2.msra.mxu0 %v709
        %780 = vmatprep.subr.mxu0 0.0
        %781 = vmatpush2.msra.mxu0 %v708
        %782 = vmatprep.subr.mxu0 0.0
        %783 = vmatpush2.msra.mxu0 %v707
        %784 = vmatprep.subr.mxu0 0.0
        %785 = vmatpush2.msra.mxu0 %v706
        %786 = vmatprep.mubr.f32.mxu0 %v379
        %787 = vmatmul.mubr.f32.gmra.mxu0 %v378
        %v788 = vpop.f32.mrf.mxu0
        %v789 = vadd.f32 0.0, %v788
        %v790 = vpop.f32.mrf.mxu0
        %791 = vmatprep.mubr.f32.mxu0 %v381
        %792 = vmatmul.mubr.f32.gmra.mxu0 %v380
        %v793 = vpop.f32.mrf.mxu0
        %v794 = vadd.f32 0.0, %v793
        %v795 = vpop.f32.mrf.mxu0
        %796 = vmatprep.mubr.f32.mxu0 %v383
        %797 = vmatmul.mubr.f32.gmra.mxu0 %v382
        %v798 = vpop.f32.mrf.mxu0
        %v799 = vadd.f32 0.0, %v798
        %v800 = vpop.f32.mrf.mxu0
        %801 = vmatprep.mubr.f32.mxu0 %v385
        %802 = vmatmul.mubr.f32.gmra.mxu0 %v384
        %v803 = vpop.f32.mrf.mxu0
        %v804 = vadd.f32 0.0, %v803
        %v805 = vpop.f32.mrf.mxu0
        %806 = vmatprep.mubr.f32.mxu0 %v387
        %807 = vmatmul.mubr.f32.gmra.mxu0 %v386
        %v808 = vpop.f32.mrf.mxu0
        %v809 = vadd.f32 0.0, %v808
        %v810 = vpop.f32.mrf.mxu0
        %811 = vmatprep.mubr.f32.mxu0 %v389
        %812 = vmatmul.mubr.f32.gmra.mxu0 %v388
        %v813 = vpop.f32.mrf.mxu0
        %v814 = vadd.f32 0.0, %v813
        %v815 = vpop.f32.mrf.mxu0
        %816 = vmatprep.mubr.f32.mxu0 %v391
        %817 = vmatmul.mubr.f32.gmra.mxu0 %v390
        %v818 = vpop.f32.mrf.mxu0
        %v819 = vadd.f32 0.0, %v818
        %v820 = vpop.f32.mrf.mxu0
        %821 = vmatprep.mubr.f32.mxu0 %v393
        %822 = vmatmul.mubr.f32.gmra.mxu0 %v392
        %v823 = vpop.f32.mrf.mxu0
        %v824 = vadd.f32 0.0, %v823
        %v825 = vpop.f32.mrf.mxu0
        %826 = vdwg.mxu0
        %v827 = vld [vmem:[%s2 + $0x10] sm:$0xff]
        %v828 = vld [vmem:[%s2 + $0x18] sm:$0xff]
        %v829 = vld [vmem:[%s4 + $0x10] sm:$0xff]
        %v830 = vld [vmem:[%s4 + $0x18] sm:$0xff]
        %v831 = vld [vmem:[%s3 + $0x40] sm:$0xff]
        %v832 = vld [vmem:[%s3 + $0x48] sm:$0xff]
        %v833 = vld [vmem:[%s3 + $0x50] sm:$0xff]
        %v834 = vld [vmem:[%s3 + $0x58] sm:$0xff]
        %v835 = vld [vmem:[%s3 + $0x60] sm:$0xff]
        %v836 = vld [vmem:[%s3 + $0x68] sm:$0xff]
        %v837 = vld [vmem:[%s3 + $0x70] sm:$0xff]
        %v838 = vld [vmem:[%s3 + $0x78] sm:$0xff]
        %v839 = vld [vmem:[%s4 + $0x70] sm:$0xff]
        %v840 = vld [vmem:[%s4 + $0x78] sm:$0xff]
        %v841 = vld [vmem:[%s4 + $0x80] sm:$0xff]
        %v842 = vld [vmem:[%s4 + $0x88] sm:$0xff]
        %v843 = vld [vmem:[%s4 + $0x90] sm:$0xff]
        %v844 = vld [vmem:[%s4 + $0x98] sm:$0xff]
        %v845 = vld [vmem:[%s4 + $0xa0] sm:$0xff]
        %v846 = vld [vmem:[%s4 + $0xa8] sm:$0xff]
        %848 = vset.pattern.permute.xlu0 0
        %849 = vperm.xlu0 %848, %v829
        %v850 = vpop.permute.xlu0 %849
        %853 = vset.pattern.permute.xlu0 0
        %854 = vperm.xlu0 %853, %v830
        %v855 = vpop.permute.xlu0 %854
        %v858 = vsel %vm424, %v827, 0
        %v861 = vsel %vm424, %v828, 0
        %863 = vmatprep.subr.mxu0 0.0
        %864 = vmatpush1.msra.mxu0 0.0
        %865 = vmatprep.subr.mxu0 0.0
        %866 = vmatpush1.msra.mxu0 0.0
        %867 = vmatprep.subr.mxu0 0.0
        %868 = vmatpush1.msra.mxu0 0.0
        %869 = vmatprep.subr.mxu0 0.0
        %870 = vmatpush1.msra.mxu0 0.0
        %871 = vmatprep.subr.mxu0 0.0
        %872 = vmatpush1.msra.mxu0 0.0
        %873 = vmatprep.subr.mxu0 0.0
        %874 = vmatpush1.msra.mxu0 0.0
        %875 = vmatprep.subr.mxu0 0.0
        %876 = vmatpush1.msra.mxu0 0.0
        %877 = vmatprep.subr.mxu0 0.0
        %878 = vmatpush1.msra.mxu0 0.0
        %879 = vmatprep.subr.mxu0 0.0
        %880 = vmatpush1.msra.mxu0 %v824
        %881 = vmatprep.subr.mxu0 0.0
        %882 = vmatpush1.msra.mxu0 %v819
        %883 = vmatprep.subr.mxu0 0.0
        %884 = vmatpush1.msra.mxu0 %v814
        %885 = vmatprep.subr.mxu0 0.0
        %886 = vmatpush1.msra.mxu0 %v809
        %887 = vmatprep.subr.mxu0 0.0
        %888 = vmatpush1.msra.mxu0 %v804
        %889 = vmatprep.subr.mxu0 0.0
        %890 = vmatpush1.msra.mxu0 %v799
        %891 = vmatprep.subr.mxu0 0.0
        %892 = vmatpush1.msra.mxu0 %v794
        %893 = vmatprep.subr.mxu0 0.0
        %894 = vmatpush1.msra.mxu0 %v789
        %895 = vmatprep.subr.mxu0 0.0
        %896 = vmatpush2.msra.mxu0 0.0
        %897 = vmatprep.subr.mxu0 0.0
        %898 = vmatpush2.msra.mxu0 0.0
        %899 = vmatprep.subr.mxu0 0.0
        %900 = vmatpush2.msra.mxu0 0.0
        %901 = vmatprep.subr.mxu0 0.0
        %902 = vmatpush2.msra.mxu0 0.0
        %903 = vmatprep.subr.mxu0 0.0
        %904 = vmatpush2.msra.mxu0 0.0
        %905 = vmatprep.subr.mxu0 0.0
        %906 = vmatpush2.msra.mxu0 0.0
        %907 = vmatprep.subr.mxu0 0.0
        %908 = vmatpush2.msra.mxu0 0.0
        %909 = vmatprep.subr.mxu0 0.0
        %910 = vmatpush2.msra.mxu0 0.0
        %911 = vmatprep.subr.mxu0 0.0
        %912 = vmatpush2.msra.mxu0 0.0
        %913 = vmatprep.subr.mxu0 0.0
        %914 = vmatpush2.msra.mxu0 0.0
        %915 = vmatprep.subr.mxu0 0.0
        %916 = vmatpush2.msra.mxu0 0.0
        %917 = vmatprep.subr.mxu0 0.0
        %918 = vmatpush2.msra.mxu0 0.0
        %919 = vmatprep.subr.mxu0 0.0
        %920 = vmatpush2.msra.mxu0 0.0
        %921 = vmatprep.subr.mxu0 0.0
        %922 = vmatpush2.msra.mxu0 0.0
        %923 = vmatprep.subr.mxu0 0.0
        %924 = vmatpush2.msra.mxu0 0.0
        %925 = vmatprep.subr.mxu0 0.0
        %926 = vmatpush2.msra.mxu0 0.0
        %927 = vmatprep.mubr.f32.mxu0 0.0
        %928 = vmatmul.mubr.f32.gmra.mxu0 %v858
        %v929 = vpop.f32.mrf.mxu0
        %v930 = vadd.f32 %v850, %v929
        %v931 = vpop.f32.mrf.mxu0
        %932 = vmatprep.mubr.f32.mxu0 0.0
        %933 = vmatmul.mubr.f32.gmra.mxu0 %v861
        %v934 = vpop.f32.mrf.mxu0
        %v935 = vadd.f32 %v855, %v934
        %v936 = vpop.f32.mrf.mxu0
        %937 = vdwg.mxu0
        %v938 = vmax.f32 %v930, 0.0
        %v939 = vmax.f32 %v935, 0.0
        %941 = vset.pattern.permute.xlu0 0
        %942 = vperm.xlu0 %941, %v839
        %v943 = vpop.permute.xlu0 %942
        %946 = vset.pattern.permute.xlu0 0
        %947 = vperm.xlu0 %946, %v840
        %v948 = vpop.permute.xlu0 %947
        %951 = vset.pattern.permute.xlu0 0
        %952 = vperm.xlu0 %951, %v841
        %v953 = vpop.permute.xlu0 %952
        %956 = vset.pattern.permute.xlu0 0
        %957 = vperm.xlu0 %956, %v842
        %v958 = vpop.permute.xlu0 %957
        %961 = vset.pattern.permute.xlu0 0
        %962 = vperm.xlu0 %961, %v843
        %v963 = vpop.permute.xlu0 %962
        %966 = vset.pattern.permute.xlu0 0
        %967 = vperm.xlu0 %966, %v844
        %v968 = vpop.permute.xlu0 %967
        %971 = vset.pattern.permute.xlu0 0
        %972 = vperm.xlu0 %971, %v845
        %v973 = vpop.permute.xlu0 %972
        %976 = vset.pattern.permute.xlu0 0
        %977 = vperm.xlu0 %976, %v846
        %v978 = vpop.permute.xlu0 %977
        %v981 = vsel %vm552, %v831, 0
        %v984 = vsel %vm552, %v832, 0
        %v987 = vsel %vm552, %v833, 0
        %v990 = vsel %vm552, %v834, 0
        %v993 = vsel %vm552, %v835, 0
        %v996 = vsel %vm552, %v836, 0
        %v999 = vsel %vm552, %v837, 0
        %v1002 = vsel %vm552, %v838, 0
        %1004 = vmatprep.subr.mxu0 0.0
        %1005 = vmatpush1.msra.mxu0 0.0
        %1006 = vmatprep.subr.mxu0 0.0
        %1007 = vmatpush1.msra.mxu0 0.0
        %1008 = vmatprep.subr.mxu0 0.0
        %1009 = vmatpush1.msra.mxu0 0.0
        %1010 = vmatprep.subr.mxu0 0.0
        %1011 = vmatpush1.msra.mxu0 0.0
        %1012 = vmatprep.subr.mxu0 0.0
        %1013 = vmatpush1.msra.mxu0 0.0
        %1014 = vmatprep.subr.mxu0 0.0
        %1015 = vmatpush1.msra.mxu0 0.0
        %1016 = vmatprep.subr.mxu0 0.0
        %1017 = vmatpush1.msra.mxu0 0.0
        %1018 = vmatprep.subr.mxu0 0.0
        %1019 = vmatpush1.msra.mxu0 0.0
        %1020 = vmatprep.subr.mxu0 0.0
        %1021 = vmatpush1.msra.mxu0 0.0
        %1022 = vmatprep.subr.mxu0 0.0
        %1023 = vmatpush1.msra.mxu0 0.0
        %1024 = vmatprep.subr.mxu0 0.0
        %1025 = vmatpush1.msra.mxu0 0.0
        %1026 = vmatprep.subr.mxu0 0.0
        %1027 = vmatpush1.msra.mxu0 0.0
        %1028 = vmatprep.subr.mxu0 0.0
        %1029 = vmatpush1.msra.mxu0 0.0
        %1030 = vmatprep.subr.mxu0 0.0
        %1031 = vmatpush1.msra.mxu0 0.0
        %1032 = vmatprep.subr.mxu0 0.0
        %1033 = vmatpush1.msra.mxu0 %v939
        %1034 = vmatprep.subr.mxu0 0.0
        %1035 = vmatpush1.msra.mxu0 %v938
        %1036 = vmatprep.subr.mxu0 0.0
        %1037 = vmatpush2.msra.mxu0 0.0
        %1038 = vmatprep.subr.mxu0 0.0
        %1039 = vmatpush2.msra.mxu0 0.0
        %1040 = vmatprep.subr.mxu0 0.0
        %1041 = vmatpush2.msra.mxu0 0.0
        %1042 = vmatprep.subr.mxu0 0.0
        %1043 = vmatpush2.msra.mxu0 0.0
        %1044 = vmatprep.subr.mxu0 0.0
        %1045 = vmatpush2.msra.mxu0 0.0
        %1046 = vmatprep.subr.mxu0 0.0
        %1047 = vmatpush2.msra.mxu0 0.0
        %1048 = vmatprep.subr.mxu0 0.0
        %1049 = vmatpush2.msra.mxu0 0.0
        %1050 = vmatprep.subr.mxu0 0.0
        %1051 = vmatpush2.msra.mxu0 0.0
        %1052 = vmatprep.subr.mxu0 0.0
        %1053 = vmatpush2.msra.mxu0 0.0
        %1054 = vmatprep.subr.mxu0 0.0
        %1055 = vmatpush2.msra.mxu0 0.0
        %1056 = vmatprep.subr.mxu0 0.0
        %1057 = vmatpush2.msra.mxu0 0.0
        %1058 = vmatprep.subr.mxu0 0.0
        %1059 = vmatpush2.msra.mxu0 0.0
        %1060 = vmatprep.subr.mxu0 0.0
        %1061 = vmatpush2.msra.mxu0 0.0
        %1062 = vmatprep.subr.mxu0 0.0
        %1063 = vmatpush2.msra.mxu0 0.0
        %1064 = vmatprep.subr.mxu0 0.0
        %1065 = vmatpush2.msra.mxu0 0.0
        %1066 = vmatprep.subr.mxu0 0.0
        %1067 = vmatpush2.msra.mxu0 0.0
        %1068 = vmatprep.mubr.f32.mxu0 0.0
        %1069 = vmatmul.mubr.f32.gmra.mxu0 %v981
        %v1070 = vpop.f32.mrf.mxu0
        %v1071 = vadd.f32 %v943, %v1070
        %v1072 = vpop.f32.mrf.mxu0
        %1073 = vmatprep.mubr.f32.mxu0 0.0
        %1074 = vmatmul.mubr.f32.gmra.mxu0 %v984
        %v1075 = vpop.f32.mrf.mxu0
        %v1076 = vadd.f32 %v948, %v1075
        %v1077 = vpop.f32.mrf.mxu0
        %1078 = vmatprep.mubr.f32.mxu0 0.0
        %1079 = vmatmul.mubr.f32.gmra.mxu0 %v987
        %v1080 = vpop.f32.mrf.mxu0
        %v1081 = vadd.f32 %v953, %v1080
        %v1082 = vpop.f32.mrf.mxu0
        %1083 = vmatprep.mubr.f32.mxu0 0.0
        %1084 = vmatmul.mubr.f32.gmra.mxu0 %v990
        %v1085 = vpop.f32.mrf.mxu0
        %v1086 = vadd.f32 %v958, %v1085
        %v1087 = vpop.f32.mrf.mxu0
        %1088 = vmatprep.mubr.f32.mxu0 0.0
        %1089 = vmatmul.mubr.f32.gmra.mxu0 %v993
        %v1090 = vpop.f32.mrf.mxu0
        %v1091 = vadd.f32 %v963, %v1090
        %v1092 = vpop.f32.mrf.mxu0
        %1093 = vmatprep.mubr.f32.mxu0 0.0
        %1094 = vmatmul.mubr.f32.gmra.mxu0 %v996
        %v1095 = vpop.f32.mrf.mxu0
        %v1096 = vadd.f32 %v968, %v1095
        %v1097 = vpop.f32.mrf.mxu0
        %1098 = vmatprep.mubr.f32.mxu0 0.0
        %1099 = vmatmul.mubr.f32.gmra.mxu0 %v999
        %v1100 = vpop.f32.mrf.mxu0
        %v1101 = vadd.f32 %v973, %v1100
        %v1102 = vpop.f32.mrf.mxu0
        %1103 = vmatprep.mubr.f32.mxu0 0.0
        %1104 = vmatmul.mubr.f32.gmra.mxu0 %v1002
        %v1105 = vpop.f32.mrf.mxu0
        %v1106 = vadd.f32 %v978, %v1105
        %v1107 = vpop.f32.mrf.mxu0
        %1108 = vdwg.mxu0
        %v1109 = vld [vmem:[#allocation7] sm:$0xff]
        %v1110 = vld [vmem:[#allocation7 + $0x8] sm:$0xff]
        %v1111 = vld [vmem:[#allocation7 + $0x10] sm:$0xff]
        %v1112 = vld [vmem:[#allocation7 + $0x18] sm:$0xff]
        %v1113 = vld [vmem:[#allocation7 + $0x20] sm:$0xff]
        %v1114 = vld [vmem:[#allocation7 + $0x28] sm:$0xff]
        %v1115 = vld [vmem:[#allocation7 + $0x30] sm:$0xff]
        %v1116 = vld [vmem:[#allocation7 + $0x38] sm:$0xff]
        %v1117 = vld [vmem:[#allocation7 + $0x40] sm:$0xff]
        %v1118 = vld [vmem:[#allocation7 + $0x48] sm:$0xff]
        %v1119 = vld [vmem:[#allocation7 + $0x50] sm:$0xff]
        %v1120 = vld [vmem:[#allocation7 + $0x58] sm:$0xff]
        %v1121 = vld [vmem:[#allocation7 + $0x60] sm:$0xff]
        %v1122 = vld [vmem:[#allocation7 + $0x68] sm:$0xff]
        %v1123 = vld [vmem:[#allocation7 + $0x70] sm:$0xff]
        %v1124 = vld [vmem:[#allocation7 + $0x78] sm:$0xff]
        %v1125 = vld [vmem:[#allocation7 + $0x80] sm:$0xff]
        %v1126 = vld [vmem:[#allocation7 + $0x88] sm:$0xff]
        %v1127 = vld [vmem:[#allocation7 + $0x90] sm:$0xff]
        %v1128 = vld [vmem:[#allocation7 + $0x98] sm:$0xff]
        %v1129 = vld [vmem:[#allocation7 + $0xa0] sm:$0xff]
        %v1130 = vld [vmem:[#allocation7 + $0xa8] sm:$0xff]
        %v1131 = vld [vmem:[#allocation7 + $0xb0] sm:$0xff]
        %v1132 = vld [vmem:[#allocation7 + $0xb8] sm:$0xff]
        %v1133 = vld [vmem:[#allocation7 + $0xc0] sm:$0xff]
        %v1134 = vld [vmem:[#allocation7 + $0xc8] sm:$0xff]
        %v1135 = vld [vmem:[#allocation7 + $0xd0] sm:$0xff]
        %v1136 = vld [vmem:[#allocation7 + $0xd8] sm:$0xff]
        %v1137 = vld [vmem:[#allocation7 + $0xe0] sm:$0xff]
        %v1138 = vld [vmem:[#allocation7 + $0xe8] sm:$0xff]
        %v1139 = vld [vmem:[#allocation7 + $0xf0] sm:$0xff]
        %v1140 = vld [vmem:[#allocation7 + $0xf8] sm:$0xff]
        %1141 = vmatprep.subr.mxu0 %v1140
        %1142 = vmatpush1.msra.mxu0 %v1139
        %1143 = vmatprep.subr.mxu0 %v1138
        %1144 = vmatpush1.msra.mxu0 %v1137
        %1145 = vmatprep.subr.mxu0 %v1136
        %1146 = vmatpush1.msra.mxu0 %v1135
        %1147 = vmatprep.subr.mxu0 %v1134
        %1148 = vmatpush1.msra.mxu0 %v1133
        %1149 = vmatprep.subr.mxu0 %v1132
        %1150 = vmatpush1.msra.mxu0 %v1131
        %1151 = vmatprep.subr.mxu0 %v1130
        %1152 = vmatpush1.msra.mxu0 %v1129
        %1153 = vmatprep.subr.mxu0 %v1128
        %1154 = vmatpush1.msra.mxu0 %v1127
        %1155 = vmatprep.subr.mxu0 %v1126
        %1156 = vmatpush1.msra.mxu0 %v1125
        %1157 = vmatprep.subr.mxu0 %v1124
        %1158 = vmatpush1.msra.mxu0 %v1123
        %1159 = vmatprep.subr.mxu0 %v1122
        %1160 = vmatpush1.msra.mxu0 %v1121
        %1161 = vmatprep.subr.mxu0 %v1120
        %1162 = vmatpush1.msra.mxu0 %v1119
        %1163 = vmatprep.subr.mxu0 %v1118
        %1164 = vmatpush1.msra.mxu0 %v1117
        %1165 = vmatprep.subr.mxu0 %v1116
        %1166 = vmatpush1.msra.mxu0 %v1115
        %1167 = vmatprep.subr.mxu0 %v1114
        %1168 = vmatpush1.msra.mxu0 %v1113
        %1169 = vmatprep.subr.mxu0 %v1112
        %1170 = vmatpush1.msra.mxu0 %v1111
        %1171 = vmatprep.subr.mxu0 %v1110
        %1172 = vmatpush1.msra.mxu0 %v1109
        %1173 = vmatprep.subr.mxu0 0.0
        %1174 = vmatpush2.msra.mxu0 0.0
        %1175 = vmatprep.subr.mxu0 0.0
        %1176 = vmatpush2.msra.mxu0 0.0
        %1177 = vmatprep.subr.mxu0 0.0
        %1178 = vmatpush2.msra.mxu0 0.0
        %1179 = vmatprep.subr.mxu0 0.0
        %1180 = vmatpush2.msra.mxu0 0.0
        %1181 = vmatprep.subr.mxu0 0.0
        %1182 = vmatpush2.msra.mxu0 0.0
        %1183 = vmatprep.subr.mxu0 0.0
        %1184 = vmatpush2.msra.mxu0 0.0
        %1185 = vmatprep.subr.mxu0 0.0
        %1186 = vmatpush2.msra.mxu0 0.0
        %1187 = vmatprep.subr.mxu0 0.0
        %1188 = vmatpush2.msra.mxu0 0.0
        %1189 = vmatprep.subr.mxu0 0.0
        %1190 = vmatpush2.msra.mxu0 0.0
        %1191 = vmatprep.subr.mxu0 0.0
        %1192 = vmatpush2.msra.mxu0 0.0
        %1193 = vmatprep.subr.mxu0 0.0
        %1194 = vmatpush2.msra.mxu0 0.0
        %1195 = vmatprep.subr.mxu0 0.0
        %1196 = vmatpush2.msra.mxu0 0.0
        %1197 = vmatprep.subr.mxu0 0.0
        %1198 = vmatpush2.msra.mxu0 0.0
        %1199 = vmatprep.subr.mxu0 0.0
        %1200 = vmatpush2.msra.mxu0 0.0
        %1201 = vmatprep.subr.mxu0 0.0
        %1202 = vmatpush2.msra.mxu0 0.0
        %1203 = vmatprep.subr.mxu0 0.0
        %1204 = vmatpush2.msra.mxu0 0.0
        %1205 = vmatprep.mubr.f32.mxu0 0.0
        %1206 = vmatmul.mubr.f32.gmra.mxu0 %v1071
        %v1207 = vpop.f32.mrf.mxu0
        %v1208 = vadd.f32 0.0, %v1207
        %v1209 = vpop.f32.mrf.mxu0
        %v1210 = vadd.f32 0.0, %v1209
        %1211 = vmatprep.mubr.f32.mxu0 0.0
        %1212 = vmatmul.mubr.f32.gmra.mxu0 %v1076
        %v1213 = vpop.f32.mrf.mxu0
        %v1214 = vadd.f32 0.0, %v1213
        %v1215 = vpop.f32.mrf.mxu0
        %v1216 = vadd.f32 0.0, %v1215
        %1217 = vmatprep.mubr.f32.mxu0 0.0
        %1218 = vmatmul.mubr.f32.gmra.mxu0 %v1081
        %v1219 = vpop.f32.mrf.mxu0
        %v1220 = vadd.f32 0.0, %v1219
        %v1221 = vpop.f32.mrf.mxu0
        %v1222 = vadd.f32 0.0, %v1221
        %1223 = vmatprep.mubr.f32.mxu0 0.0
        %1224 = vmatmul.mubr.f32.gmra.mxu0 %v1086
        %v1225 = vpop.f32.mrf.mxu0
        %v1226 = vadd.f32 0.0, %v1225
        %v1227 = vpop.f32.mrf.mxu0
        %v1228 = vadd.f32 0.0, %v1227
        %1229 = vmatprep.mubr.f32.mxu0 0.0
        %1230 = vmatmul.mubr.f32.gmra.mxu0 %v1091
        %v1231 = vpop.f32.mrf.mxu0
        %v1232 = vadd.f32 0.0, %v1231
        %v1233 = vpop.f32.mrf.mxu0
        %v1234 = vadd.f32 0.0, %v1233
        %1235 = vmatprep.mubr.f32.mxu0 0.0
        %1236 = vmatmul.mubr.f32.gmra.mxu0 %v1096
        %v1237 = vpop.f32.mrf.mxu0
        %v1238 = vadd.f32 0.0, %v1237
        %v1239 = vpop.f32.mrf.mxu0
        %v1240 = vadd.f32 0.0, %v1239
        %1241 = vmatprep.mubr.f32.mxu0 0.0
        %1242 = vmatmul.mubr.f32.gmra.mxu0 %v1101
        %v1243 = vpop.f32.mrf.mxu0
        %v1244 = vadd.f32 0.0, %v1243
        %v1245 = vpop.f32.mrf.mxu0
        %v1246 = vadd.f32 0.0, %v1245
        %1247 = vmatprep.mubr.f32.mxu0 0.0
        %1248 = vmatmul.mubr.f32.gmra.mxu0 %v1106
        %v1249 = vpop.f32.mrf.mxu0
        %v1250 = vadd.f32 0.0, %v1249
        %v1251 = vpop.f32.mrf.mxu0
        %v1252 = vadd.f32 0.0, %v1251
        %1253 = vdwg.mxu0
        %v1254 = vadd.f32 %v644, %v1208
        %v1255 = vadd.f32 %v646, %v1210
        %v1256 = vadd.f32 %v650, %v1214
        %v1257 = vadd.f32 %v652, %v1216
        %v1258 = vadd.f32 %v656, %v1220
        %v1259 = vadd.f32 %v658, %v1222
        %v1260 = vadd.f32 %v662, %v1226
        %v1261 = vadd.f32 %v664, %v1228
        %v1262 = vadd.f32 %v668, %v1232
        %v1263 = vadd.f32 %v670, %v1234
        %v1264 = vadd.f32 %v674, %v1238
        %v1265 = vadd.f32 %v676, %v1240
        %v1266 = vadd.f32 %v680, %v1244
        %v1267 = vadd.f32 %v682, %v1246
        %v1268 = vadd.f32 %v686, %v1250
        %v1269 = vadd.f32 %v688, %v1252
        %v1270 = vmul.f32 %v1254, 0.5
        %v1271 = vmul.f32 %v1255, 0.5
        %v1272 = vmul.f32 %v1256, 0.5
        %v1273 = vmul.f32 %v1257, 0.5
        %v1274 = vmul.f32 %v1258, 0.5
        %v1275 = vmul.f32 %v1259, 0.5
        %v1276 = vmul.f32 %v1260, 0.5
        %v1277 = vmul.f32 %v1261, 0.5
        %v1278 = vmul.f32 %v1262, 0.5
        %v1279 = vmul.f32 %v1263, 0.5
        %v1280 = vmul.f32 %v1264, 0.5
        %v1281 = vmul.f32 %v1265, 0.5
        %v1282 = vmul.f32 %v1266, 0.5
        %v1283 = vmul.f32 %v1267, 0.5
        %v1284 = vmul.f32 %v1268, 0.5
        %v1285 = vmul.f32 %v1269, 0.5
        %v1286 = vtanh.pop %v1270
        %v1287 = vtanh.pop %v1271
        %v1288 = vtanh.pop %v1272
        %v1289 = vtanh.pop %v1273
        %v1290 = vtanh.pop %v1274
        %v1291 = vtanh.pop %v1275
        %v1292 = vtanh.pop %v1276
        %v1293 = vtanh.pop %v1277
        %v1294 = vtanh.pop %v1278
        %v1295 = vtanh.pop %v1279
        %v1296 = vtanh.pop %v1280
        %v1297 = vtanh.pop %v1281
        %v1298 = vtanh.pop %v1282
        %v1299 = vtanh.pop %v1283
        %v1300 = vtanh.pop %v1284
        %v1301 = vtanh.pop %v1285
        %v1302 = vadd.f32 %v1286, 1.0
        %v1303 = vadd.f32 %v1287, 1.0
        %v1304 = vadd.f32 %v1288, 1.0
        %v1305 = vadd.f32 %v1289, 1.0
        %v1306 = vadd.f32 %v1290, 1.0
        %v1307 = vadd.f32 %v1291, 1.0
        %v1308 = vadd.f32 %v1292, 1.0
        %v1309 = vadd.f32 %v1293, 1.0
        %v1310 = vadd.f32 %v1294, 1.0
        %v1311 = vadd.f32 %v1295, 1.0
        %v1312 = vadd.f32 %v1296, 1.0
        %v1313 = vadd.f32 %v1297, 1.0
        %v1314 = vadd.f32 %v1298, 1.0
        %v1315 = vadd.f32 %v1299, 1.0
        %v1316 = vadd.f32 %v1300, 1.0
        %v1317 = vadd.f32 %v1301, 1.0
        %v1318 = vmul.f32 %v1302, 0.5
        %v1319 = vmul.f32 %v1303, 0.5
        %v1320 = vmul.f32 %v1304, 0.5
        %v1321 = vmul.f32 %v1305, 0.5
        %v1322 = vmul.f32 %v1306, 0.5
        %v1323 = vmul.f32 %v1307, 0.5
        %v1324 = vmul.f32 %v1308, 0.5
        %v1325 = vmul.f32 %v1309, 0.5
        %v1326 = vmul.f32 %v1310, 0.5
        %v1327 = vmul.f32 %v1311, 0.5
        %v1328 = vmul.f32 %v1312, 0.5
        %v1329 = vmul.f32 %v1313, 0.5
        %v1330 = vmul.f32 %v1314, 0.5
        %v1331 = vmul.f32 %v1315, 0.5
        %v1332 = vmul.f32 %v1316, 0.5
        %v1333 = vmul.f32 %v1317, 0.5
        %v1334 = vmul.f32 %v346, %v1318
        %v1335 = vmul.f32 %v347, %v1319
        %v1336 = vmul.f32 %v348, %v1320
        %v1337 = vmul.f32 %v349, %v1321
        %v1338 = vmul.f32 %v350, %v1322
        %v1339 = vmul.f32 %v351, %v1323
        %v1340 = vmul.f32 %v352, %v1324
        %v1341 = vmul.f32 %v353, %v1325
        %v1342 = vmul.f32 %v354, %v1326
        %v1343 = vmul.f32 %v355, %v1327
        %v1344 = vmul.f32 %v356, %v1328
        %v1345 = vmul.f32 %v357, %v1329
        %v1346 = vmul.f32 %v358, %v1330
        %v1347 = vmul.f32 %v359, %v1331
        %v1348 = vmul.f32 %v360, %v1332
        %v1349 = vmul.f32 %v361, %v1333
        %v1350 = vsub.f32 1.0, %v1318
        %v1351 = vsub.f32 1.0, %v1319
        %v1352 = vsub.f32 1.0, %v1320
        %v1353 = vsub.f32 1.0, %v1321
        %v1354 = vsub.f32 1.0, %v1322
        %v1355 = vsub.f32 1.0, %v1323
        %v1356 = vsub.f32 1.0, %v1324
        %v1357 = vsub.f32 1.0, %v1325
        %v1358 = vsub.f32 1.0, %v1326
        %v1359 = vsub.f32 1.0, %v1327
        %v1360 = vsub.f32 1.0, %v1328
        %v1361 = vsub.f32 1.0, %v1329
        %v1362 = vsub.f32 1.0, %v1330
        %v1363 = vsub.f32 1.0, %v1331
        %v1364 = vsub.f32 1.0, %v1332
        %v1365 = vsub.f32 1.0, %v1333
        %v1366 = vmul.f32 %v362, %v1350
        %v1367 = vmul.f32 %v363, %v1351
        %v1368 = vmul.f32 %v364, %v1352
        %v1369 = vmul.f32 %v365, %v1353
        %v1370 = vmul.f32 %v366, %v1354
        %v1371 = vmul.f32 %v367, %v1355
        %v1372 = vmul.f32 %v368, %v1356
        %v1373 = vmul.f32 %v369, %v1357
        %v1374 = vmul.f32 %v370, %v1358
        %v1375 = vmul.f32 %v371, %v1359
        %v1376 = vmul.f32 %v372, %v1360
        %v1377 = vmul.f32 %v373, %v1361
        %v1378 = vmul.f32 %v374, %v1362
        %v1379 = vmul.f32 %v375, %v1363
        %v1380 = vmul.f32 %v376, %v1364
        %v1381 = vmul.f32 %v377, %v1365
        %v1382 = vadd.f32 %v1334, %v1366
        %v1383 = vadd.f32 %v1335, %v1367
        %v1384 = vadd.f32 %v1336, %v1368
        %v1385 = vadd.f32 %v1337, %v1369
        %v1386 = vadd.f32 %v1338, %v1370
        %v1387 = vadd.f32 %v1339, %v1371
        %v1388 = vadd.f32 %v1340, %v1372
        %v1389 = vadd.f32 %v1341, %v1373
        %v1390 = vadd.f32 %v1342, %v1374
        %v1391 = vadd.f32 %v1343, %v1375
        %v1392 = vadd.f32 %v1344, %v1376
        %v1393 = vadd.f32 %v1345, %v1377
        %v1394 = vadd.f32 %v1346, %v1378
        %v1395 = vadd.f32 %v1347, %v1379
        %v1396 = vadd.f32 %v1348, %v1380
        %v1397 = vadd.f32 %v1349, %v1381
        %v1398 = vld [vmem:[%s2 + $0x20] sm:$0xff]
        %v1399 = vld [vmem:[%s2 + $0x28] sm:$0xff]
        %v1400 = vld [vmem:[%s4 + $0x20] sm:$0xff]
        %v1401 = vld [vmem:[%s4 + $0x28] sm:$0xff]
        %v1402 = vld [vmem:[%s3 + $0x80] sm:$0xff]
        %v1403 = vld [vmem:[%s3 + $0x88] sm:$0xff]
        %v1404 = vld [vmem:[%s3 + $0x90] sm:$0xff]
        %v1405 = vld [vmem:[%s3 + $0x98] sm:$0xff]
        %v1406 = vld [vmem:[%s3 + $0xa0] sm:$0xff]
        %v1407 = vld [vmem:[%s3 + $0xa8] sm:$0xff]
        %v1408 = vld [vmem:[%s3 + $0xb0] sm:$0xff]
        %v1409 = vld [vmem:[%s3 + $0xb8] sm:$0xff]
        %v1410 = vld [vmem:[%s4 + $0xb0] sm:$0xff]
        %v1411 = vld [vmem:[%s4 + $0xb8] sm:$0xff]
        %v1412 = vld [vmem:[%s4 + $0xc0] sm:$0xff]
        %v1413 = vld [vmem:[%s4 + $0xc8] sm:$0xff]
        %v1414 = vld [vmem:[%s4 + $0xd0] sm:$0xff]
        %v1415 = vld [vmem:[%s4 + $0xd8] sm:$0xff]
        %v1416 = vld [vmem:[%s4 + $0xe0] sm:$0xff]
        %v1417 = vld [vmem:[%s4 + $0xe8] sm:$0xff]
        %1419 = vset.pattern.permute.xlu0 0
        %1420 = vperm.xlu0 %1419, %v1400
        %v1421 = vpop.permute.xlu0 %1420
        %1424 = vset.pattern.permute.xlu0 0
        %1425 = vperm.xlu0 %1424, %v1401
        %v1426 = vpop.permute.xlu0 %1425
        %v1429 = vsel %vm424, %v1398, 0
        %v1432 = vsel %vm424, %v1399, 0
        %1434 = vmatprep.subr.mxu0 0.0
        %1435 = vmatpush1.msra.mxu0 0.0
        %1436 = vmatprep.subr.mxu0 0.0
        %1437 = vmatpush1.msra.mxu0 0.0
        %1438 = vmatprep.subr.mxu0 0.0
        %1439 = vmatpush1.msra.mxu0 0.0
        %1440 = vmatprep.subr.mxu0 0.0
        %1441 = vmatpush1.msra.mxu0 0.0
        %1442 = vmatprep.subr.mxu0 0.0
        %1443 = vmatpush1.msra.mxu0 0.0
        %1444 = vmatprep.subr.mxu0 0.0
        %1445 = vmatpush1.msra.mxu0 0.0
        %1446 = vmatprep.subr.mxu0 0.0
        %1447 = vmatpush1.msra.mxu0 0.0
        %1448 = vmatprep.subr.mxu0 0.0
        %1449 = vmatpush1.msra.mxu0 0.0
        %1450 = vmatprep.subr.mxu0 %v1397
        %1451 = vmatpush1.msra.mxu0 %v1396
        %1452 = vmatprep.subr.mxu0 %v1395
        %1453 = vmatpush1.msra.mxu0 %v1394
        %1454 = vmatprep.subr.mxu0 %v1393
        %1455 = vmatpush1.msra.mxu0 %v1392
        %1456 = vmatprep.subr.mxu0 %v1391
        %1457 = vmatpush1.msra.mxu0 %v1390
        %1458 = vmatprep.subr.mxu0 %v1389
        %1459 = vmatpush1.msra.mxu0 %v1388
        %1460 = vmatprep.subr.mxu0 %v1387
        %1461 = vmatpush1.msra.mxu0 %v1386
        %1462 = vmatprep.subr.mxu0 %v1385
        %1463 = vmatpush1.msra.mxu0 %v1384
        %1464 = vmatprep.subr.mxu0 %v1383
        %1465 = vmatpush1.msra.mxu0 %v1382
        %1466 = vmatprep.subr.mxu0 0.0
        %1467 = vmatpush2.msra.mxu0 0.0
        %1468 = vmatprep.subr.mxu0 0.0
        %1469 = vmatpush2.msra.mxu0 0.0
        %1470 = vmatprep.subr.mxu0 0.0
        %1471 = vmatpush2.msra.mxu0 0.0
        %1472 = vmatprep.subr.mxu0 0.0
        %1473 = vmatpush2.msra.mxu0 0.0
        %1474 = vmatprep.subr.mxu0 0.0
        %1475 = vmatpush2.msra.mxu0 0.0
        %1476 = vmatprep.subr.mxu0 0.0
        %1477 = vmatpush2.msra.mxu0 0.0
        %1478 = vmatprep.subr.mxu0 0.0
        %1479 = vmatpush2.msra.mxu0 0.0
        %1480 = vmatprep.subr.mxu0 0.0
        %1481 = vmatpush2.msra.mxu0 0.0
        %1482 = vmatprep.subr.mxu0 0.0
        %1483 = vmatpush2.msra.mxu0 0.0
        %1484 = vmatprep.subr.mxu0 0.0
        %1485 = vmatpush2.msra.mxu0 0.0
        %1486 = vmatprep.subr.mxu0 0.0
        %1487 = vmatpush2.msra.mxu0 0.0
        %1488 = vmatprep.subr.mxu0 0.0
        %1489 = vmatpush2.msra.mxu0 0.0
        %1490 = vmatprep.subr.mxu0 0.0
        %1491 = vmatpush2.msra.mxu0 0.0
        %1492 = vmatprep.subr.mxu0 0.0
        %1493 = vmatpush2.msra.mxu0 0.0
        %1494 = vmatprep.subr.mxu0 0.0
        %1495 = vmatpush2.msra.mxu0 0.0
        %1496 = vmatprep.subr.mxu0 0.0
        %1497 = vmatpush2.msra.mxu0 0.0
        %1498 = vmatprep.mubr.f32.mxu0 0.0
        %1499 = vmatmul.mubr.f32.gmra.mxu0 %v1429
        %v1500 = vpop.f32.mrf.mxu0
        %v1501 = vadd.f32 %v1421, %v1500
        %v1502 = vpop.f32.mrf.mxu0
        %v1503 = vadd.f32 %v1421, %v1502
        %1504 = vmatprep.mubr.f32.mxu0 0.0
        %1505 = vmatmul.mubr.f32.gmra.mxu0 %v1432
        %v1506 = vpop.f32.mrf.mxu0
        %v1507 = vadd.f32 %v1426, %v1506
        %v1508 = vpop.f32.mrf.mxu0
        %v1509 = vadd.f32 %v1426, %v1508
        %1510 = vdwg.mxu0
        %v1511 = vmax.f32 %v1501, 0.0
        %v1512 = vmax.f32 %v1503, 0.0
        %v1513 = vmax.f32 %v1507, 0.0
        %v1514 = vmax.f32 %v1509, 0.0
        %1516 = vset.pattern.permute.xlu0 0
        %1517 = vperm.xlu0 %1516, %v1410
        %v1518 = vpop.permute.xlu0 %1517
        %1521 = vset.pattern.permute.xlu0 0
        %1522 = vperm.xlu0 %1521, %v1411
        %v1523 = vpop.permute.xlu0 %1522
        %1526 = vset.pattern.permute.xlu0 0
        %1527 = vperm.xlu0 %1526, %v1412
        %v1528 = vpop.permute.xlu0 %1527
        %1531 = vset.pattern.permute.xlu0 0
        %1532 = vperm.xlu0 %1531, %v1413
        %v1533 = vpop.permute.xlu0 %1532
        %1536 = vset.pattern.permute.xlu0 0
        %1537 = vperm.xlu0 %1536, %v1414
        %v1538 = vpop.permute.xlu0 %1537
        %1541 = vset.pattern.permute.xlu0 0
        %1542 = vperm.xlu0 %1541, %v1415
        %v1543 = vpop.permute.xlu0 %1542
        %1546 = vset.pattern.permute.xlu0 0
        %1547 = vperm.xlu0 %1546, %v1416
        %v1548 = vpop.permute.xlu0 %1547
        %1551 = vset.pattern.permute.xlu0 0
        %1552 = vperm.xlu0 %1551, %v1417
        %v1553 = vpop.permute.xlu0 %1552
        %v1556 = vsel %vm552, %v1402, 0
        %v1559 = vsel %vm552, %v1403, 0
        %v1562 = vsel %vm552, %v1404, 0
        %v1565 = vsel %vm552, %v1405, 0
        %v1568 = vsel %vm552, %v1406, 0
        %v1571 = vsel %vm552, %v1407, 0
        %v1574 = vsel %vm552, %v1408, 0
        %v1577 = vsel %vm552, %v1409, 0
        %1579 = vmatprep.subr.mxu0 0.0
        %1580 = vmatpush1.msra.mxu0 0.0
        %1581 = vmatprep.subr.mxu0 0.0
        %1582 = vmatpush1.msra.mxu0 0.0
        %1583 = vmatprep.subr.mxu0 0.0
        %1584 = vmatpush1.msra.mxu0 0.0
        %1585 = vmatprep.subr.mxu0 0.0
        %1586 = vmatpush1.msra.mxu0 0.0
        %1587 = vmatprep.subr.mxu0 0.0
        %1588 = vmatpush1.msra.mxu0 0.0
        %1589 = vmatprep.subr.mxu0 0.0
        %1590 = vmatpush1.msra.mxu0 0.0
        %1591 = vmatprep.subr.mxu0 0.0
        %1592 = vmatpush1.msra.mxu0 0.0
        %1593 = vmatprep.subr.mxu0 0.0
        %1594 = vmatpush1.msra.mxu0 0.0
        %1595 = vmatprep.subr.mxu0 0.0
        %1596 = vmatpush1.msra.mxu0 0.0
        %1597 = vmatprep.subr.mxu0 0.0
        %1598 = vmatpush1.msra.mxu0 0.0
        %1599 = vmatprep.subr.mxu0 0.0
        %1600 = vmatpush1.msra.mxu0 0.0
        %1601 = vmatprep.subr.mxu0 0.0
        %1602 = vmatpush1.msra.mxu0 0.0
        %1603 = vmatprep.subr.mxu0 0.0
        %1604 = vmatpush1.msra.mxu0 0.0
        %1605 = vmatprep.subr.mxu0 0.0
        %1606 = vmatpush1.msra.mxu0 0.0
        %1607 = vmatprep.subr.mxu0 %v1514
        %1608 = vmatpush1.msra.mxu0 %v1513
        %1609 = vmatprep.subr.mxu0 %v1512
        %1610 = vmatpush1.msra.mxu0 %v1511
        %1611 = vmatprep.subr.mxu0 0.0
        %1612 = vmatpush2.msra.mxu0 0.0
        %1613 = vmatprep.subr.mxu0 0.0
        %1614 = vmatpush2.msra.mxu0 0.0
        %1615 = vmatprep.subr.mxu0 0.0
        %1616 = vmatpush2.msra.mxu0 0.0
        %1617 = vmatprep.subr.mxu0 0.0
        %1618 = vmatpush2.msra.mxu0 0.0
        %1619 = vmatprep.subr.mxu0 0.0
        %1620 = vmatpush2.msra.mxu0 0.0
        %1621 = vmatprep.subr.mxu0 0.0
        %1622 = vmatpush2.msra.mxu0 0.0
        %1623 = vmatprep.subr.mxu0 0.0
        %1624 = vmatpush2.msra.mxu0 0.0
        %1625 = vmatprep.subr.mxu0 0.0
        %1626 = vmatpush2.msra.mxu0 0.0
        %1627 = vmatprep.subr.mxu0 0.0
        %1628 = vmatpush2.msra.mxu0 0.0
        %1629 = vmatprep.subr.mxu0 0.0
        %1630 = vmatpush2.msra.mxu0 0.0
        %1631 = vmatprep.subr.mxu0 0.0
        %1632 = vmatpush2.msra.mxu0 0.0
        %1633 = vmatprep.subr.mxu0 0.0
        %1634 = vmatpush2.msra.mxu0 0.0
        %1635 = vmatprep.subr.mxu0 0.0
        %1636 = vmatpush2.msra.mxu0 0.0
        %1637 = vmatprep.subr.mxu0 0.0
        %1638 = vmatpush2.msra.mxu0 0.0
        %1639 = vmatprep.subr.mxu0 0.0
        %1640 = vmatpush2.msra.mxu0 0.0
        %1641 = vmatprep.subr.mxu0 0.0
        %1642 = vmatpush2.msra.mxu0 0.0
        %1643 = vmatprep.mubr.f32.mxu0 0.0
        %1644 = vmatmul.mubr.f32.gmra.mxu0 %v1556
        %v1645 = vpop.f32.mrf.mxu0
        %v1646 = vadd.f32 %v1518, %v1645
        %v1647 = vpop.f32.mrf.mxu0
        %v1648 = vadd.f32 %v1518, %v1647
        %1649 = vmatprep.mubr.f32.mxu0 0.0
        %1650 = vmatmul.mubr.f32.gmra.mxu0 %v1559
        %v1651 = vpop.f32.mrf.mxu0
        %v1652 = vadd.f32 %v1523, %v1651
        %v1653 = vpop.f32.mrf.mxu0
        %v1654 = vadd.f32 %v1523, %v1653
        %1655 = vmatprep.mubr.f32.mxu0 0.0
        %1656 = vmatmul.mubr.f32.gmra.mxu0 %v1562
        %v1657 = vpop.f32.mrf.mxu0
        %v1658 = vadd.f32 %v1528, %v1657
        %v1659 = vpop.f32.mrf.mxu0
        %v1660 = vadd.f32 %v1528, %v1659
        %1661 = vmatprep.mubr.f32.mxu0 0.0
        %1662 = vmatmul.mubr.f32.gmra.mxu0 %v1565
        %v1663 = vpop.f32.mrf.mxu0
        %v1664 = vadd.f32 %v1533, %v1663
        %v1665 = vpop.f32.mrf.mxu0
        %v1666 = vadd.f32 %v1533, %v1665
        %1667 = vmatprep.mubr.f32.mxu0 0.0
        %1668 = vmatmul.mubr.f32.gmra.mxu0 %v1568
        %v1669 = vpop.f32.mrf.mxu0
        %v1670 = vadd.f32 %v1538, %v1669
        %v1671 = vpop.f32.mrf.mxu0
        %v1672 = vadd.f32 %v1538, %v1671
        %1673 = vmatprep.mubr.f32.mxu0 0.0
        %1674 = vmatmul.mubr.f32.gmra.mxu0 %v1571
        %v1675 = vpop.f32.mrf.mxu0
        %v1676 = vadd.f32 %v1543, %v1675
        %v1677 = vpop.f32.mrf.mxu0
        %v1678 = vadd.f32 %v1543, %v1677
        %1679 = vmatprep.mubr.f32.mxu0 0.0
        %1680 = vmatmul.mubr.f32.gmra.mxu0 %v1574
        %v1681 = vpop.f32.mrf.mxu0
        %v1682 = vadd.f32 %v1548, %v1681
        %v1683 = vpop.f32.mrf.mxu0
        %v1684 = vadd.f32 %v1548, %v1683
        %1685 = vmatprep.mubr.f32.mxu0 0.0
        %1686 = vmatmul.mubr.f32.gmra.mxu0 %v1577
        %v1687 = vpop.f32.mrf.mxu0
        %v1688 = vadd.f32 %v1553, %v1687
        %v1689 = vpop.f32.mrf.mxu0
        %v1690 = vadd.f32 %v1553, %v1689
        %1691 = vdwg.mxu0
        %1692 = vmatprep.subr.mxu0 0.0
        %1693 = vmatpush1.msra.mxu0 %v705
        %1694 = vmatprep.subr.mxu0 0.0
        %1695 = vmatpush1.msra.mxu0 %v704
        %1696 = vmatprep.subr.mxu0 0.0
        %1697 = vmatpush1.msra.mxu0 %v703
        %1698 = vmatprep.subr.mxu0 0.0
        %1699 = vmatpush1.msra.mxu0 %v702
        %1700 = vmatprep.subr.mxu0 0.0
        %1701 = vmatpush1.msra.mxu0 %v701
        %1702 = vmatprep.subr.mxu0 0.0
        %1703 = vmatpush1.msra.mxu0 %v700
        %1704 = vmatprep.subr.mxu0 0.0
        %1705 = vmatpush1.msra.mxu0 %v699
        %1706 = vmatprep.subr.mxu0 0.0
        %1707 = vmatpush1.msra.mxu0 %v698
        %1708 = vmatprep.subr.mxu0 0.0
        %1709 = vmatpush1.msra.mxu0 %v697
        %1710 = vmatprep.subr.mxu0 0.0
        %1711 = vmatpush1.msra.mxu0 %v696
        %1712 = vmatprep.subr.mxu0 0.0
        %1713 = vmatpush1.msra.mxu0 %v695
        %1714 = vmatprep.subr.mxu0 0.0
        %1715 = vmatpush1.msra.mxu0 %v694
        %1716 = vmatprep.subr.mxu0 0.0
        %1717 = vmatpush1.msra.mxu0 %v693
        %1718 = vmatprep.subr.mxu0 0.0
        %1719 = vmatpush1.msra.mxu0 %v692
        %1720 = vmatprep.subr.mxu0 0.0
        %1721 = vmatpush1.msra.mxu0 %v691
        %1722 = vmatprep.subr.mxu0 0.0
        %1723 = vmatpush1.msra.mxu0 %v690
        %1724 = vmatprep.subr.mxu0 0.0
        %1725 = vmatpush2.msra.mxu0 %v721
        %1726 = vmatprep.subr.mxu0 0.0
        %1727 = vmatpush2.msra.mxu0 %v720
        %1728 = vmatprep.subr.mxu0 0.0
        %1729 = vmatpush2.msra.mxu0 %v719
        %1730 = vmatprep.subr.mxu0 0.0
        %1731 = vmatpush2.msra.mxu0 %v718
        %1732 = vmatprep.subr.mxu0 0.0
        %1733 = vmatpush2.msra.mxu0 %v717
        %1734 = vmatprep.subr.mxu0 0.0
        %1735 = vmatpush2.msra.mxu0 %v716
        %1736 = vmatprep.subr.mxu0 0.0
        %1737 = vmatpush2.msra.mxu0 %v715
        %1738 = vmatprep.subr.mxu0 0.0
        %1739 = vmatpush2.msra.mxu0 %v714
        %1740 = vmatprep.subr.mxu0 0.0
        %1741 = vmatpush2.msra.mxu0 %v713
        %1742 = vmatprep.subr.mxu0 0.0
        %1743 = vmatpush2.msra.mxu0 %v712
        %1744 = vmatprep.subr.mxu0 0.0
        %1745 = vmatpush2.msra.mxu0 %v711
        %1746 = vmatprep.subr.mxu0 0.0
        %1747 = vmatpush2.msra.mxu0 %v710
        %1748 = vmatprep.subr.mxu0 0.0
        %1749 = vmatpush2.msra.mxu0 %v709
        %1750 = vmatprep.subr.mxu0 0.0
        %1751 = vmatpush2.msra.mxu0 %v708
        %1752 = vmatprep.subr.mxu0 0.0
        %1753 = vmatpush2.msra.mxu0 %v707
        %1754 = vmatprep.subr.mxu0 0.0
        %1755 = vmatpush2.msra.mxu0 %v706
        %1756 = vmatprep.mubr.f32.mxu0 %v1383
        %1757 = vmatmul.mubr.f32.gmra.mxu0 %v1382
        %v1758 = vpop.f32.mrf.mxu0
        %v1759 = vadd.f32 0.0, %v1758
        %v1760 = vpop.f32.mrf.mxu0
        %1761 = vmatprep.mubr.f32.mxu0 %v1385
        %1762 = vmatmul.mubr.f32.gmra.mxu0 %v1384
        %v1763 = vpop.f32.mrf.mxu0
        %v1764 = vadd.f32 0.0, %v1763
        %v1765 = vpop.f32.mrf.mxu0
        %1766 = vmatprep.mubr.f32.mxu0 %v1387
        %1767 = vmatmul.mubr.f32.gmra.mxu0 %v1386
        %v1768 = vpop.f32.mrf.mxu0
        %v1769 = vadd.f32 0.0, %v1768
        %v1770 = vpop.f32.mrf.mxu0
        %1771 = vmatprep.mubr.f32.mxu0 %v1389
        %1772 = vmatmul.mubr.f32.gmra.mxu0 %v1388
        %v1773 = vpop.f32.mrf.mxu0
        %v1774 = vadd.f32 0.0, %v1773
        %v1775 = vpop.f32.mrf.mxu0
        %1776 = vmatprep.mubr.f32.mxu0 %v1391
        %1777 = vmatmul.mubr.f32.gmra.mxu0 %v1390
        %v1778 = vpop.f32.mrf.mxu0
        %v1779 = vadd.f32 0.0, %v1778
        %v1780 = vpop.f32.mrf.mxu0
        %1781 = vmatprep.mubr.f32.mxu0 %v1393
        %1782 = vmatmul.mubr.f32.gmra.mxu0 %v1392
        %v1783 = vpop.f32.mrf.mxu0
        %v1784 = vadd.f32 0.0, %v1783
        %v1785 = vpop.f32.mrf.mxu0
        %1786 = vmatprep.mubr.f32.mxu0 %v1395
        %1787 = vmatmul.mubr.f32.gmra.mxu0 %v1394
        %v1788 = vpop.f32.mrf.mxu0
        %v1789 = vadd.f32 0.0, %v1788
        %v1790 = vpop.f32.mrf.mxu0
        %1791 = vmatprep.mubr.f32.mxu0 %v1397
        %1792 = vmatmul.mubr.f32.gmra.mxu0 %v1396
        %v1793 = vpop.f32.mrf.mxu0
        %v1794 = vadd.f32 0.0, %v1793
        %v1795 = vpop.f32.mrf.mxu0
        %1796 = vdwg.mxu0
        %1797 = vmatprep.subr.mxu0 0.0
        %1798 = vmatpush1.msra.mxu0 0.0
        %1799 = vmatprep.subr.mxu0 0.0
        %1800 = vmatpush1.msra.mxu0 0.0
        %1801 = vmatprep.subr.mxu0 0.0
        %1802 = vmatpush1.msra.mxu0 0.0
        %1803 = vmatprep.subr.mxu0 0.0
        %1804 = vmatpush1.msra.mxu0 0.0
        %1805 = vmatprep.subr.mxu0 0.0
        %1806 = vmatpush1.msra.mxu0 0.0
        %1807 = vmatprep.subr.mxu0 0.0
        %1808 = vmatpush1.msra.mxu0 0.0
        %1809 = vmatprep.subr.mxu0 0.0
        %1810 = vmatpush1.msra.mxu0 0.0
        %1811 = vmatprep.subr.mxu0 0.0
        %1812 = vmatpush1.msra.mxu0 0.0
        %1813 = vmatprep.subr.mxu0 0.0
        %1814 = vmatpush1.msra.mxu0 %v1794
        %1815 = vmatprep.subr.mxu0 0.0
        %1816 = vmatpush1.msra.mxu0 %v1789
        %1817 = vmatprep.subr.mxu0 0.0
        %1818 = vmatpush1.msra.mxu0 %v1784
        %1819 = vmatprep.subr.mxu0 0.0
        %1820 = vmatpush1.msra.mxu0 %v1779
        %1821 = vmatprep.subr.mxu0 0.0
        %1822 = vmatpush1.msra.mxu0 %v1774
        %1823 = vmatprep.subr.mxu0 0.0
        %1824 = vmatpush1.msra.mxu0 %v1769
        %1825 = vmatprep.subr.mxu0 0.0
        %1826 = vmatpush1.msra.mxu0 %v1764
        %1827 = vmatprep.subr.mxu0 0.0
        %1828 = vmatpush1.msra.mxu0 %v1759
        %1829 = vmatprep.subr.mxu0 0.0
        %1830 = vmatpush2.msra.mxu0 0.0
        %1831 = vmatprep.subr.mxu0 0.0
        %1832 = vmatpush2.msra.mxu0 0.0
        %1833 = vmatprep.subr.mxu0 0.0
        %1834 = vmatpush2.msra.mxu0 0.0
        %1835 = vmatprep.subr.mxu0 0.0
        %1836 = vmatpush2.msra.mxu0 0.0
        %1837 = vmatprep.subr.mxu0 0.0
        %1838 = vmatpush2.msra.mxu0 0.0
        %1839 = vmatprep.subr.mxu0 0.0
        %1840 = vmatpush2.msra.mxu0 0.0
        %1841 = vmatprep.subr.mxu0 0.0
        %1842 = vmatpush2.msra.mxu0 0.0
        %1843 = vmatprep.subr.mxu0 0.0
        %1844 = vmatpush2.msra.mxu0 0.0
        %1845 = vmatprep.subr.mxu0 0.0
        %1846 = vmatpush2.msra.mxu0 0.0
        %1847 = vmatprep.subr.mxu0 0.0
        %1848 = vmatpush2.msra.mxu0 0.0
        %1849 = vmatprep.subr.mxu0 0.0
        %1850 = vmatpush2.msra.mxu0 0.0
        %1851 = vmatprep.subr.mxu0 0.0
        %1852 = vmatpush2.msra.mxu0 0.0
        %1853 = vmatprep.subr.mxu0 0.0
        %1854 = vmatpush2.msra.mxu0 0.0
        %1855 = vmatprep.subr.mxu0 0.0
        %1856 = vmatpush2.msra.mxu0 0.0
        %1857 = vmatprep.subr.mxu0 0.0
        %1858 = vmatpush2.msra.mxu0 0.0
        %1859 = vmatprep.subr.mxu0 0.0
        %1860 = vmatpush2.msra.mxu0 0.0
        %1861 = vmatprep.mubr.f32.mxu0 0.0
        %1862 = vmatmul.mubr.f32.gmra.mxu0 %v858
        %v1863 = vpop.f32.mrf.mxu0
        %v1864 = vadd.f32 %v850, %v1863
        %v1865 = vpop.f32.mrf.mxu0
        %1866 = vmatprep.mubr.f32.mxu0 0.0
        %1867 = vmatmul.mubr.f32.gmra.mxu0 %v861
        %v1868 = vpop.f32.mrf.mxu0
        %v1869 = vadd.f32 %v855, %v1868
        %v1870 = vpop.f32.mrf.mxu0
        %1871 = vdwg.mxu0
        %v1872 = vmax.f32 %v1864, 0.0
        %v1873 = vmax.f32 %v1869, 0.0
        %1874 = vmatprep.subr.mxu0 0.0
        %1875 = vmatpush1.msra.mxu0 0.0
        %1876 = vmatprep.subr.mxu0 0.0
        %1877 = vmatpush1.msra.mxu0 0.0
        %1878 = vmatprep.subr.mxu0 0.0
        %1879 = vmatpush1.msra.mxu0 0.0
        %1880 = vmatprep.subr.mxu0 0.0
        %1881 = vmatpush1.msra.mxu0 0.0
        %1882 = vmatprep.subr.mxu0 0.0
        %1883 = vmatpush1.msra.mxu0 0.0
        %1884 = vmatprep.subr.mxu0 0.0
        %1885 = vmatpush1.msra.mxu0 0.0
        %1886 = vmatprep.subr.mxu0 0.0
        %1887 = vmatpush1.msra.mxu0 0.0
        %1888 = vmatprep.subr.mxu0 0.0
        %1889 = vmatpush1.msra.mxu0 0.0
        %1890 = vmatprep.subr.mxu0 0.0
        %1891 = vmatpush1.msra.mxu0 0.0
        %1892 = vmatprep.subr.mxu0 0.0
        %1893 = vmatpush1.msra.mxu0 0.0
        %1894 = vmatprep.subr.mxu0 0.0
        %1895 = vmatpush1.msra.mxu0 0.0
        %1896 = vmatprep.subr.mxu0 0.0
        %1897 = vmatpush1.msra.mxu0 0.0
        %1898 = vmatprep.subr.mxu0 0.0
        %1899 = vmatpush1.msra.mxu0 0.0
        %1900 = vmatprep.subr.mxu0 0.0
        %1901 = vmatpush1.msra.mxu0 0.0
        %1902 = vmatprep.subr.mxu0 0.0
        %1903 = vmatpush1.msra.mxu0 %v1873
        %1904 = vmatprep.subr.mxu0 0.0
        %1905 = vmatpush1.msra.mxu0 %v1872
        %1906 = vmatprep.subr.mxu0 0.0
        %1907 = vmatpush2.msra.mxu0 0.0
        %1908 = vmatprep.subr.mxu0 0.0
        %1909 = vmatpush2.msra.mxu0 0.0
        %1910 = vmatprep.subr.mxu0 0.0
        %1911 = vmatpush2.msra.mxu0 0.0
        %1912 = vmatprep.subr.mxu0 0.0
        %1913 = vmatpush2.msra.mxu0 0.0
        %1914 = vmatprep.subr.mxu0 0.0
        %1915 = vmatpush2.msra.mxu0 0.0
        %1916 = vmatprep.subr.mxu0 0.0
        %1917 = vmatpush2.msra.mxu0 0.0
        %1918 = vmatprep.subr.mxu0 0.0
        %1919 = vmatpush2.msra.mxu0 0.0
        %1920 = vmatprep.subr.mxu0 0.0
        %1921 = vmatpush2.msra.mxu0 0.0
        %1922 = vmatprep.subr.mxu0 0.0
        %1923 = vmatpush2.msra.mxu0 0.0
        %1924 = vmatprep.subr.mxu0 0.0
        %1925 = vmatpush2.msra.mxu0 0.0
        %1926 = vmatprep.subr.mxu0 0.0
        %1927 = vmatpush2.msra.mxu0 0.0
        %1928 = vmatprep.subr.mxu0 0.0
        %1929 = vmatpush2.msra.mxu0 0.0
        %1930 = vmatprep.subr.mxu0 0.0
        %1931 = vmatpush2.msra.mxu0 0.0
        %1932 = vmatprep.subr.mxu0 0.0
        %1933 = vmatpush2.msra.mxu0 0.0
        %1934 = vmatprep.subr.mxu0 0.0
        %1935 = vmatpush2.msra.mxu0 0.0
        %1936 = vmatprep.subr.mxu0 0.0
        %1937 = vmatpush2.msra.mxu0 0.0
        %1938 = vmatprep.mubr.f32.mxu0 0.0
        %1939 = vmatmul.mubr.f32.gmra.mxu0 %v981
        %v1940 = vpop.f32.mrf.mxu0
        %v1941 = vadd.f32 %v943, %v1940
        %v1942 = vpop.f32.mrf.mxu0
        %1943 = vmatprep.mubr.f32.mxu0 0.0
        %1944 = vmatmul.mubr.f32.gmra.mxu0 %v984
        %v1945 = vpop.f32.mrf.mxu0
        %v1946 = vadd.f32 %v948, %v1945
        %v1947 = vpop.f32.mrf.mxu0
        %1948 = vmatprep.mubr.f32.mxu0 0.0
        %1949 = vmatmul.mubr.f32.gmra.mxu0 %v987
        %v1950 = vpop.f32.mrf.mxu0
        %v1951 = vadd.f32 %v953, %v1950
        %v1952 = vpop.f32.mrf.mxu0
        %1953 = vmatprep.mubr.f32.mxu0 0.0
        %1954 = vmatmul.mubr.f32.gmra.mxu0 %v990
        %v1955 = vpop.f32.mrf.mxu0
        %v1956 = vadd.f32 %v958, %v1955
        %v1957 = vpop.f32.mrf.mxu0
        %1958 = vmatprep.mubr.f32.mxu0 0.0
        %1959 = vmatmul.mubr.f32.gmra.mxu0 %v993
        %v1960 = vpop.f32.mrf.mxu0
        %v1961 = vadd.f32 %v963, %v1960
        %v1962 = vpop.f32.mrf.mxu0
        %1963 = vmatprep.mubr.f32.mxu0 0.0
        %1964 = vmatmul.mubr.f32.gmra.mxu0 %v996
        %v1965 = vpop.f32.mrf.mxu0
        %v1966 = vadd.f32 %v968, %v1965
        %v1967 = vpop.f32.mrf.mxu0
        %1968 = vmatprep.mubr.f32.mxu0 0.0
        %1969 = vmatmul.mubr.f32.gmra.mxu0 %v999
        %v1970 = vpop.f32.mrf.mxu0
        %v1971 = vadd.f32 %v973, %v1970
        %v1972 = vpop.f32.mrf.mxu0
        %1973 = vmatprep.mubr.f32.mxu0 0.0
        %1974 = vmatmul.mubr.f32.gmra.mxu0 %v1002
        %v1975 = vpop.f32.mrf.mxu0
        %v1976 = vadd.f32 %v978, %v1975
        %v1977 = vpop.f32.mrf.mxu0
        %1978 = vdwg.mxu0
        %1979 = vmatprep.subr.mxu0 %v1140
        %1980 = vmatpush1.msra.mxu0 %v1139
        %1981 = vmatprep.subr.mxu0 %v1138
        %1982 = vmatpush1.msra.mxu0 %v1137
        %1983 = vmatprep.subr.mxu0 %v1136
        %1984 = vmatpush1.msra.mxu0 %v1135
        %1985 = vmatprep.subr.mxu0 %v1134
        %1986 = vmatpush1.msra.mxu0 %v1133
        %1987 = vmatprep.subr.mxu0 %v1132
        %1988 = vmatpush1.msra.mxu0 %v1131
        %1989 = vmatprep.subr.mxu0 %v1130
        %1990 = vmatpush1.msra.mxu0 %v1129
        %1991 = vmatprep.subr.mxu0 %v1128
        %1992 = vmatpush1.msra.mxu0 %v1127
        %1993 = vmatprep.subr.mxu0 %v1126
        %1994 = vmatpush1.msra.mxu0 %v1125
        %1995 = vmatprep.subr.mxu0 %v1124
        %1996 = vmatpush1.msra.mxu0 %v1123
        %1997 = vmatprep.subr.mxu0 %v1122
        %1998 = vmatpush1.msra.mxu0 %v1121
        %1999 = vmatprep.subr.mxu0 %v1120
        %2000 = vmatpush1.msra.mxu0 %v1119
        %2001 = vmatprep.subr.mxu0 %v1118
        %2002 = vmatpush1.msra.mxu0 %v1117
        %2003 = vmatprep.subr.mxu0 %v1116
        %2004 = vmatpush1.msra.mxu0 %v1115
        %2005 = vmatprep.subr.mxu0 %v1114
        %2006 = vmatpush1.msra.mxu0 %v1113
        %2007 = vmatprep.subr.mxu0 %v1112
        %2008 = vmatpush1.msra.mxu0 %v1111
        %2009 = vmatprep.subr.mxu0 %v1110
        %2010 = vmatpush1.msra.mxu0 %v1109
        %2011 = vmatprep.subr.mxu0 0.0
        %2012 = vmatpush2.msra.mxu0 0.0
        %2013 = vmatprep.subr.mxu0 0.0
        %2014 = vmatpush2.msra.mxu0 0.0
        %2015 = vmatprep.subr.mxu0 0.0
        %2016 = vmatpush2.msra.mxu0 0.0
        %2017 = vmatprep.subr.mxu0 0.0
        %2018 = vmatpush2.msra.mxu0 0.0
        %2019 = vmatprep.subr.mxu0 0.0
        %2020 = vmatpush2.msra.mxu0 0.0
        %2021 = vmatprep.subr.mxu0 0.0
        %2022 = vmatpush2.msra.mxu0 0.0
        %2023 = vmatprep.subr.mxu0 0.0
        %2024 = vmatpush2.msra.mxu0 0.0
        %2025 = vmatprep.subr.mxu0 0.0
        %2026 = vmatpush2.msra.mxu0 0.0
        %2027 = vmatprep.subr.mxu0 0.0
        %2028 = vmatpush2.msra.mxu0 0.0
        %2029 = vmatprep.subr.mxu0 0.0
        %2030 = vmatpush2.msra.mxu0 0.0
        %2031 = vmatprep.subr.mxu0 0.0
        %2032 = vmatpush2.msra.mxu0 0.0
        %2033 = vmatprep.subr.mxu0 0.0
        %2034 = vmatpush2.msra.mxu0 0.0
        %2035 = vmatprep.subr.mxu0 0.0
        %2036 = vmatpush2.msra.mxu0 0.0
        %2037 = vmatprep.subr.mxu0 0.0
        %2038 = vmatpush2.msra.mxu0 0.0
        %2039 = vmatprep.subr.mxu0 0.0
        %2040 = vmatpush2.msra.mxu0 0.0
        %2041 = vmatprep.subr.mxu0 0.0
        %2042 = vmatpush2.msra.mxu0 0.0
        %2043 = vmatprep.mubr.f32.mxu0 0.0
        %2044 = vmatmul.mubr.f32.gmra.mxu0 %v1941
        %v2045 = vpop.f32.mrf.mxu0
        %v2046 = vadd.f32 0.0, %v2045
        %v2047 = vpop.f32.mrf.mxu0
        %v2048 = vadd.f32 0.0, %v2047
        %2049 = vmatprep.mubr.f32.mxu0 0.0
        %2050 = vmatmul.mubr.f32.gmra.mxu0 %v1946
        %v2051 = vpop.f32.mrf.mxu0
        %v2052 = vadd.f32 0.0, %v2051
        %v2053 = vpop.f32.mrf.mxu0
        %v2054 = vadd.f32 0.0, %v2053
        %2055 = vmatprep.mubr.f32.mxu0 0.0
        %2056 = vmatmul.mubr.f32.gmra.mxu0 %v1951
        %v2057 = vpop.f32.mrf.mxu0
        %v2058 = vadd.f32 0.0, %v2057
        %v2059 = vpop.f32.mrf.mxu0
        %v2060 = vadd.f32 0.0, %v2059
        %2061 = vmatprep.mubr.f32.mxu0 0.0
        %2062 = vmatmul.mubr.f32.gmra.mxu0 %v1956
        %v2063 = vpop.f32.mrf.mxu0
        %v2064 = vadd.f32 0.0, %v2063
        %v2065 = vpop.f32.mrf.mxu0
        %v2066 = vadd.f32 0.0, %v2065
        %2067 = vmatprep.mubr.f32.mxu0 0.0
        %2068 = vmatmul.mubr.f32.gmra.mxu0 %v1961
        %v2069 = vpop.f32.mrf.mxu0
        %v2070 = vadd.f32 0.0, %v2069
        %v2071 = vpop.f32.mrf.mxu0
        %v2072 = vadd.f32 0.0, %v2071
        %2073 = vmatprep.mubr.f32.mxu0 0.0
        %2074 = vmatmul.mubr.f32.gmra.mxu0 %v1966
        %v2075 = vpop.f32.mrf.mxu0
        %v2076 = vadd.f32 0.0, %v2075
        %v2077 = vpop.f32.mrf.mxu0
        %v2078 = vadd.f32 0.0, %v2077
        %2079 = vmatprep.mubr.f32.mxu0 0.0
        %2080 = vmatmul.mubr.f32.gmra.mxu0 %v1971
        %v2081 = vpop.f32.mrf.mxu0
        %v2082 = vadd.f32 0.0, %v2081
        %v2083 = vpop.f32.mrf.mxu0
        %v2084 = vadd.f32 0.0, %v2083
        %2085 = vmatprep.mubr.f32.mxu0 0.0
        %2086 = vmatmul.mubr.f32.gmra.mxu0 %v1976
        %v2087 = vpop.f32.mrf.mxu0
        %v2088 = vadd.f32 0.0, %v2087
        %v2089 = vpop.f32.mrf.mxu0
        %v2090 = vadd.f32 0.0, %v2089
        %2091 = vdwg.mxu0
        %v2092 = vadd.f32 %v1646, %v2046
        %v2093 = vadd.f32 %v1648, %v2048
        %v2094 = vadd.f32 %v1652, %v2052
        %v2095 = vadd.f32 %v1654, %v2054
        %v2096 = vadd.f32 %v1658, %v2058
        %v2097 = vadd.f32 %v1660, %v2060
        %v2098 = vadd.f32 %v1664, %v2064
        %v2099 = vadd.f32 %v1666, %v2066
        %v2100 = vadd.f32 %v1670, %v2070
        %v2101 = vadd.f32 %v1672, %v2072
        %v2102 = vadd.f32 %v1676, %v2076
        %v2103 = vadd.f32 %v1678, %v2078
        %v2104 = vadd.f32 %v1682, %v2082
        %v2105 = vadd.f32 %v1684, %v2084
        %v2106 = vadd.f32 %v1688, %v2088
        %v2107 = vadd.f32 %v1690, %v2090
        %v2108 = vmul.f32 %v2092, 0.5
        %v2109 = vmul.f32 %v2093, 0.5
        %v2110 = vmul.f32 %v2094, 0.5
        %v2111 = vmul.f32 %v2095, 0.5
        %v2112 = vmul.f32 %v2096, 0.5
        %v2113 = vmul.f32 %v2097, 0.5
        %v2114 = vmul.f32 %v2098, 0.5
        %v2115 = vmul.f32 %v2099, 0.5
        %v2116 = vmul.f32 %v2100, 0.5
        %v2117 = vmul.f32 %v2101, 0.5
        %v2118 = vmul.f32 %v2102, 0.5
        %v2119 = vmul.f32 %v2103, 0.5
        %v2120 = vmul.f32 %v2104, 0.5
        %v2121 = vmul.f32 %v2105, 0.5
        %v2122 = vmul.f32 %v2106, 0.5
        %v2123 = vmul.f32 %v2107, 0.5
        %v2124 = vtanh.pop %v2108
        %v2125 = vtanh.pop %v2109
        %v2126 = vtanh.pop %v2110
        %v2127 = vtanh.pop %v2111
        %v2128 = vtanh.pop %v2112
        %v2129 = vtanh.pop %v2113
        %v2130 = vtanh.pop %v2114
        %v2131 = vtanh.pop %v2115
        %v2132 = vtanh.pop %v2116
        %v2133 = vtanh.pop %v2117
        %v2134 = vtanh.pop %v2118
        %v2135 = vtanh.pop %v2119
        %v2136 = vtanh.pop %v2120
        %v2137 = vtanh.pop %v2121
        %v2138 = vtanh.pop %v2122
        %v2139 = vtanh.pop %v2123
        %v2140 = vadd.f32 %v2124, 1.0
        %v2141 = vadd.f32 %v2125, 1.0
        %v2142 = vadd.f32 %v2126, 1.0
        %v2143 = vadd.f32 %v2127, 1.0
        %v2144 = vadd.f32 %v2128, 1.0
        %v2145 = vadd.f32 %v2129, 1.0
        %v2146 = vadd.f32 %v2130, 1.0
        %v2147 = vadd.f32 %v2131, 1.0
        %v2148 = vadd.f32 %v2132, 1.0
        %v2149 = vadd.f32 %v2133, 1.0
        %v2150 = vadd.f32 %v2134, 1.0
        %v2151 = vadd.f32 %v2135, 1.0
        %v2152 = vadd.f32 %v2136, 1.0
        %v2153 = vadd.f32 %v2137, 1.0
        %v2154 = vadd.f32 %v2138, 1.0
        %v2155 = vadd.f32 %v2139, 1.0
        %v2156 = vmul.f32 %v2140, 0.5
        %v2157 = vmul.f32 %v2141, 0.5
        %v2158 = vmul.f32 %v2142, 0.5
        %v2159 = vmul.f32 %v2143, 0.5
        %v2160 = vmul.f32 %v2144, 0.5
        %v2161 = vmul.f32 %v2145, 0.5
        %v2162 = vmul.f32 %v2146, 0.5
        %v2163 = vmul.f32 %v2147, 0.5
        %v2164 = vmul.f32 %v2148, 0.5
        %v2165 = vmul.f32 %v2149, 0.5
        %v2166 = vmul.f32 %v2150, 0.5
        %v2167 = vmul.f32 %v2151, 0.5
        %v2168 = vmul.f32 %v2152, 0.5
        %v2169 = vmul.f32 %v2153, 0.5
        %v2170 = vmul.f32 %v2154, 0.5
        %v2171 = vmul.f32 %v2155, 0.5
        %v2172 = vmul.f32 %v346, %v2156
        %v2173 = vmul.f32 %v347, %v2157
        %v2174 = vmul.f32 %v348, %v2158
        %v2175 = vmul.f32 %v349, %v2159
        %v2176 = vmul.f32 %v350, %v2160
        %v2177 = vmul.f32 %v351, %v2161
        %v2178 = vmul.f32 %v352, %v2162
        %v2179 = vmul.f32 %v353, %v2163
        %v2180 = vmul.f32 %v354, %v2164
        %v2181 = vmul.f32 %v355, %v2165
        %v2182 = vmul.f32 %v356, %v2166
        %v2183 = vmul.f32 %v357, %v2167
        %v2184 = vmul.f32 %v358, %v2168
        %v2185 = vmul.f32 %v359, %v2169
        %v2186 = vmul.f32 %v360, %v2170
        %v2187 = vmul.f32 %v361, %v2171
        %v2188 = vsub.f32 1.0, %v2156
        %v2189 = vsub.f32 1.0, %v2157
        %v2190 = vsub.f32 1.0, %v2158
        %v2191 = vsub.f32 1.0, %v2159
        %v2192 = vsub.f32 1.0, %v2160
        %v2193 = vsub.f32 1.0, %v2161
        %v2194 = vsub.f32 1.0, %v2162
        %v2195 = vsub.f32 1.0, %v2163
        %v2196 = vsub.f32 1.0, %v2164
        %v2197 = vsub.f32 1.0, %v2165
        %v2198 = vsub.f32 1.0, %v2166
        %v2199 = vsub.f32 1.0, %v2167
        %v2200 = vsub.f32 1.0, %v2168
        %v2201 = vsub.f32 1.0, %v2169
        %v2202 = vsub.f32 1.0, %v2170
        %v2203 = vsub.f32 1.0, %v2171
        %v2204 = vmul.f32 %v362, %v2188
        %v2205 = vmul.f32 %v363, %v2189
        %v2206 = vmul.f32 %v364, %v2190
        %v2207 = vmul.f32 %v365, %v2191
        %v2208 = vmul.f32 %v366, %v2192
        %v2209 = vmul.f32 %v367, %v2193
        %v2210 = vmul.f32 %v368, %v2194
        %v2211 = vmul.f32 %v369, %v2195
        %v2212 = vmul.f32 %v370, %v2196
        %v2213 = vmul.f32 %v371, %v2197
        %v2214 = vmul.f32 %v372, %v2198
        %v2215 = vmul.f32 %v373, %v2199
        %v2216 = vmul.f32 %v374, %v2200
        %v2217 = vmul.f32 %v375, %v2201
        %v2218 = vmul.f32 %v376, %v2202
        %v2219 = vmul.f32 %v377, %v2203
        %v2220 = vadd.f32 %v2172, %v2204
        %v2221 = vadd.f32 %v2173, %v2205
        %v2222 = vadd.f32 %v2174, %v2206
        %v2223 = vadd.f32 %v2175, %v2207
        %v2224 = vadd.f32 %v2176, %v2208
        %v2225 = vadd.f32 %v2177, %v2209
        %v2226 = vadd.f32 %v2178, %v2210
        %v2227 = vadd.f32 %v2179, %v2211
        %v2228 = vadd.f32 %v2180, %v2212
        %v2229 = vadd.f32 %v2181, %v2213
        %v2230 = vadd.f32 %v2182, %v2214
        %v2231 = vadd.f32 %v2183, %v2215
        %v2232 = vadd.f32 %v2184, %v2216
        %v2233 = vadd.f32 %v2185, %v2217
        %v2234 = vadd.f32 %v2186, %v2218
        %v2235 = vadd.f32 %v2187, %v2219
        %2236 = vst [vmem:[%s340] sm:$0xff] %v2220
        %2237 = vst [vmem:[%s340 + $0x8] sm:$0xff] %v2221
        %2238 = vst [vmem:[%s340 + $0x10] sm:$0xff] %v2222
        %2239 = vst [vmem:[%s340 + $0x18] sm:$0xff] %v2223
        %2240 = vst [vmem:[%s340 + $0x20] sm:$0xff] %v2224
        %2241 = vst [vmem:[%s340 + $0x28] sm:$0xff] %v2225
        %2242 = vst [vmem:[%s340 + $0x30] sm:$0xff] %v2226
        %2243 = vst [vmem:[%s340 + $0x38] sm:$0xff] %v2227
        %2244 = vst [vmem:[%s340 + $0x40] sm:$0xff] %v2228
        %2245 = vst [vmem:[%s340 + $0x48] sm:$0xff] %v2229
        %2246 = vst [vmem:[%s340 + $0x50] sm:$0xff] %v2230
        %2247 = vst [vmem:[%s340 + $0x58] sm:$0xff] %v2231
        %2248 = vst [vmem:[%s340 + $0x60] sm:$0xff] %v2232
        %2249 = vst [vmem:[%s340 + $0x68] sm:$0xff] %v2233
        %2250 = vst [vmem:[%s340 + $0x70] sm:$0xff] %v2234
        %2251 = vst [vmem:[%s340 + $0x78] sm:$0xff] %v2235
        %s2252 = sand.u32 %s190, 1
        %s2253 = scalar_lea.sflag [#allocation4], %s2252
        %s2254 = sand.u32 %s190, 1
        %s2255 = smul.addr %s2254, 128
        %s2256 = scalar_lea.vmem [#allocation8], %s2255
        // Predicated region
        $region61: #{tpu_custom_call.1} parent=47 // pred_check
          %p2257 = pneg %p200
        $region62: #{tpu_custom_call.1} parent=47 // pred_check_branch
          %2259 = sbr.rel (%p2257) target = $region64
        $region63: #{tpu_custom_call.1} parent=47 // pred_region
          %s2261 = ssub.s32 2048, 2048
          %2262 = vsyncadd %s2253, %s2261
          %s2263 = smul.addr %s25, 16
          %s2264 = smul.addr %s2263, 128
          %s2265 = scalar_lea.hbm %s7, %s2264
          %s2266 = sshll.u32 %s2256, 4
          %s2267 = int_to_ptr.vmem [resolvable:$true] %s2266
          %2272 = dma.vmem_to_hbm [thread:$0]  %s2267, 2048, %s2265, %s2253, 256, 256, 16
        $region64: #{tpu_custom_call.1} parent=47 // pred_fallthru
          _
      $region48: #{tpu_custom_call.1} parent=5 // pred_fallthru
        _
      %p2273 = scmp.le.s32.totalorder 2, %s20
      // Predicated region
      $region65: #{tpu_custom_call.1} parent=5 // pred_check
        %p2274 = pneg %p2273
      $region66: #{tpu_custom_call.1} parent=5 // pred_check_branch
        %2276 = sbr.rel (%p2274) target = $region68
      $region67: #{tpu_custom_call.1} parent=5 // pred_region
        %s2277 = ssub.s32 %s20, 2
        // Predicated region
        $region69: #{tpu_custom_call.1} parent=67 // pred_check
          %p2278 = pneg %p206
        $region70: #{tpu_custom_call.1} parent=67 // pred_check_branch
          %2280 = sbr.rel (%p2278) target = $region72
        $region71: #{tpu_custom_call.1} parent=67 // pred_region
          %s2281 = sand.u32 %s191, 1
          %s2282 = scalar_lea.sflag [#allocation4], %s2281
          %s2283 = sand.u32 %s191, 1
          %s2284 = smul.addr %s2283, 128
          %s2285 = scalar_lea.vmem [#allocation8], %s2284
          %2286 = dma.done %s2282, 2048
        $region72: #{tpu_custom_call.1} parent=67 // pred_fallthru
          _
      $region68: #{tpu_custom_call.1} parent=5 // pred_fallthru
        _
    $region6: #{tpu_custom_call.1} parent=1 // loop_footer
      %s24 = sadd.s32 1, %s20
    $region7: #{tpu_custom_call.1} parent=1 // loop_footer_branch
      %19 = sbr.rel target = $region3
    $region8: #{tpu_custom_call.1} parent=1 // loop_exit
      _
    %2287 = vsyncpa [#allocation3], 1
    %s2288 = scalar_lea.sflag [#allocation3], 1
    %2289 = vsyncpa %s2288, 1
    %2290 = vsyncpa [#allocation6], 1
    %2291 = vsyncpa [#allocation4], 1
    %s2292 = scalar_lea.sflag [#allocation4], 1
    %2293 = vsyncpa %s2292, 1

</llo_original>
